<compile_context>
chip_gen: v5e
topology: v5e:2x2
jax: 0.10.0
libtpu: 0.0.40
codegen_flags: <defaults>
</compile_context>

<pallas_src>
import functools

import jax
import jax.numpy as jnp
from jax.experimental import pallas as pl
from jax.experimental.pallas import tpu as pltpu

# ---- config (mirrors cfg['MODEL'][...]) -------------------------------------
PROJ_DIM = 32          # cfg['MODEL']['PROJECTION']['DIM']
PROJ_PAD = 128         # lane-dense padded projection width (zero-padded, exact)
NUM_ANCHORS = 10       # FPNEncoder.num_anchors
TEMPERATURE = 0.5      # cfg['MODEL']['PROJECTION']['TEMPERATURE']
FPN_LEVEL_SIZES = [(16, 16), (8, 8), (4, 4)]   # stand-in FPN pyramid levels

# Grid-less whole-array specs (kernels run exactly once; no pipelining needed).
_VMEM = pl.BlockSpec(memory_space=pltpu.MemorySpace.VMEM)
_SMEM = pl.BlockSpec(memory_space=pltpu.MemorySpace.SMEM)


# =============================== Pallas kernels ==============================

def _fused_mlp_kernel(x_ref, w1_ref, b1_ref, w2_ref, b2_ref, o_ref):
    # Fused (M,K)@(K,512)+b1 -> ReLU -> (512,128)+b2, all resident in VMEM.
    # Weights arrive as bf16; accumulation in f32.
    x = x_ref[...].astype(jnp.bfloat16)
    h = jnp.dot(x, w1_ref[...], preferred_element_type=jnp.float32) + b1_ref[...]
    h = jnp.maximum(h, 0.0)
    o_ref[...] = (jnp.dot(h.astype(jnp.bfloat16), w2_ref[...],
                          preferred_element_type=jnp.float32) + b2_ref[...])


def _loss_sim_kernel(z_i_ref, z_j_ref, z_a_ref, loss_ref, sim_ref, *, temperature):
    # Anchor-based NT-Xent loss + similarity map (exact torch semantics).
    # Inputs are zero-padded to PROJ_PAD columns; padding contributes 0 to
    # every norm / dot, so the results are exact.
    zi = z_i_ref[...].astype(jnp.float32)          # (B, Dp)
    zj = z_j_ref[...].astype(jnp.float32)          # (B, Dp)
    za = z_a_ref[...].astype(jnp.float32)          # (B, A, Dp)

    def l2norm(v, axis):
        # F.normalize: v / max(||v||, 1e-12)  ==  v * rsqrt(max(sum v^2, 1e-24))
        ss = jnp.sum(v * v, axis=axis, keepdims=True)
        return v * jax.lax.rsqrt(jnp.maximum(ss, 1e-24))

    zin = l2norm(zi, 1)
    zjn = l2norm(zj, 1)
    zan = l2norm(za, 2)

    # similarity_map quirk of the reference:
    #   sum_d(zi_norm[:,d,None] * zj_norm[:,None,:], dim=1)
    #   == rowsum(zi_norm)[:,None] * zj_norm   (padded columns stay zero)
    sim_ref[...] = jnp.sum(zin, axis=1, keepdims=True) * zjn

    b = zi.shape[0]
    rows = jax.lax.broadcasted_iota(jnp.int32, (b, b), 0)
    cols = jax.lax.broadcasted_iota(jnp.int32, (b, b), 1)
    diag = rows == cols

    # Positive similarity directly (no diagonal extraction needed).
    pos = jnp.sum(zin * zjn, axis=1, keepdims=True)                         # (B,1)
    # Inter-sample negatives: one MXU dot.
    dot_ij = jax.lax.dot_general(zin, zjn, (((1,), (1,)), ((), ())),
                                 preferred_element_type=jnp.float32)        # (B,B)
    # Anchor negatives: VPU multiply + reduce (no degenerate q=1 matmuls).
    neg_anch = jnp.sum(zin[:, None, :] * zan, axis=-1)                      # (B,A)

    pos = pos / temperature
    neg_inter = dot_ij / temperature
    neg_anch = neg_anch / temperature

    neg_big = -1e30  # stands in for -inf; exponentiated only after masking
    neg_inter_masked = jnp.where(diag, neg_big, neg_inter)

    m = jnp.maximum(pos, jnp.max(neg_inter_masked, axis=1, keepdims=True))
    m = jnp.maximum(m, jnp.max(neg_anch, axis=1, keepdims=True))

    e_pos = jnp.exp(pos - m)
    e_int = jnp.where(diag, 0.0, jnp.exp(neg_inter_masked - m))
    e_anc = jnp.exp(neg_anch - m)
    denom = (e_pos + jnp.sum(e_int, axis=1, keepdims=True)
             + jnp.sum(e_anc, axis=1, keepdims=True))

    lse = m + jnp.log(denom)                     # (B, 1)
    loss_ref[0, 0] = jnp.mean(lse - pos)         # cross_entropy with label 0


# ============================== Pallas wrappers ==============================

def pallas_fused_mlp(x, w1, b1, w2, b2):
    """x @ W1 + b1 -> ReLU -> @ W2 + b2 in one grid-less pallas_call."""
    m, k = x.shape
    kw = w1.shape[0]
    if k < kw:  # zero-pad tiny contracting dim (3 -> 8): exact (padded W rows are 0)
        x = jnp.pad(x, ((0, 0), (0, kw - k)))
    n = w2.shape[1]
    return pl.pallas_call(
        _fused_mlp_kernel,
        in_specs=[_VMEM, _VMEM, _VMEM, _VMEM, _VMEM],
        out_specs=_VMEM,
        out_shape=jax.ShapeDtypeStruct((m, n), jnp.float32),
    )(x, w1, b1, w2, b2)


def pallas_loss_and_sim(z_i, z_j, z_a, temperature):
    b, dp = z_i.shape
    kernel = functools.partial(_loss_sim_kernel, temperature=float(temperature))
    loss, sim = pl.pallas_call(
        kernel,
        in_specs=[_VMEM, _VMEM, _VMEM],
        out_specs=(_SMEM, _VMEM),   # scalar loss in SMEM, sim map in VMEM
        out_shape=(jax.ShapeDtypeStruct((1, 1), jnp.float32),
                   jax.ShapeDtypeStruct((b, dp), jnp.float32)),
    )(z_i, z_j, z_a)
    return loss[0, 0], sim


# ================================ glue (JAX) =================================

def avg_pool_nchw(x, out_h, out_w):
    b, c, h, w = x.shape
    fh, fw = h // out_h, w // out_w
    return x.reshape(b, c, out_h, fh, out_w, fw).mean(axis=(3, 5))


def pipeline1_resnet_encoder(x_i, p):
    """ResNetEncoder: backbone -> adaptive avgpool -> Linear -> ReLU -> Linear."""
    # TODO(synk): pretrained ResNet50 backbone replaced by a deterministic
    #             avg-pool + 1x1-conv stem; being linear, the stem is folded
    #             into fc1 at param-prep time and AdaptiveAvgPool2d((1,1))
    #             commutes with it exactly (mean of conv == conv of mean).
    gap = x_i.mean(axis=(2, 3))                                        # (B, 3)
    return pallas_fused_mlp(gap, p['p1_w1'], p['p1_b1'],
                            p['p1_w2'], p['p1_b2'])                    # (B, PROJ_PAD)


def pipeline2_fpn_encoder(x_j, crop_coords, p, key):
    """FPNEncoder: per-level proj_head + positive/negative feature sampling.

    Sample-then-project: the pos/neg indices depend only on grid coords,
    crop_coords and the RNG key (never on features), and the proj_head is a
    stack of 1x1 convs (pointwise), so projecting only the sampled rows is
    mathematically identical to projecting the full maps and gathering.
    """
    # TODO(synk): pretrained resnet_fpn_backbone replaced by per-level avg-pool
    #             + a shared 1x1-conv stem folded into the proj_head's first conv.
    b, _, _, w_img = x_j.shape
    num_levels = len(FPN_LEVEL_SIZES)
    level_keys = jax.random.split(key, num_levels)

    pos_pix_levels, neg_pix_levels = [], []
    for li, (h, w) in enumerate(FPN_LEVEL_SIZES):
        pooled = avg_pool_nchw(x_j, h, w)                              # (B,3,h,w)
        pix = pooled.transpose(0, 2, 3, 1).reshape(b, h * w, 3)        # (B,hw,3)

        gy = jnp.arange(h, dtype=jnp.float32)
        gx = jnp.arange(w, dtype=jnp.float32)
        gyy, gxx = jnp.meshgrid(gy, gx, indexing='ij')
        scale = w_img / h                                              # reference quirk
        grid_flat = jnp.stack([gxx, gyy], axis=-1).reshape(h * w, 2) * scale

        sample_keys = jax.random.split(level_keys[li], b)

        def select_idx(coord, key_b, grid_flat=grid_flat, hw=h * w):
            y0, x0, hc, wc = coord[0], coord[1], coord[2], coord[3]
            center = jnp.stack([x0 + wc / 2.0, y0 + hc / 2.0])
            dists = jnp.sum((grid_flat - center[None, :]) ** 2, axis=-1)   # (hw,)
            min_idx = jnp.argmin(dists)
            thr = dists[min_idx] * 2.0
            valid = dists > thr
            # TODO(synk): torch.randperm over valid cells (and the
            #             <num_anchors resample-with-replacement fallback)
            #             replaced by a deterministic random top-k ranking
            #             that prefers valid cells.
            scores = jax.random.uniform(key_b, (hw,))
            _, neg_idx = jax.lax.top_k(jnp.where(valid, -scores, -scores - 2.0),
                                       NUM_ANCHORS)
            return min_idx, neg_idx

        min_idx, neg_idx = jax.vmap(select_idx)(crop_coords, sample_keys)
        pos_pix = jax.vmap(lambda rows, i: rows[i])(pix, min_idx)          # (B,3)
        neg_pix = jax.vmap(lambda rows, i: rows[i])(pix, neg_idx)          # (B,A,3)
        pos_pix_levels.append(pos_pix)
        neg_pix_levels.append(neg_pix)

    # One fused proj_head call over ALL sampled rows: L*B*(1+A) = 66 rows.
    pos_slab = jnp.stack(pos_pix_levels, axis=0).reshape(num_levels * b, 3)
    neg_slab = jnp.stack(neg_pix_levels, axis=0).reshape(
        num_levels * b * NUM_ANCHORS, 3)
    slab = jnp.concatenate([pos_slab, neg_slab], axis=0)               # (66, 3)
    proj = pallas_fused_mlp(slab, p['fpn_w1'], p['fpn_b1'],
                            p['fpn_w2'], p['fpn_b2'])                  # (66, PROJ_PAD)

    n_pos = num_levels * b
    pos = proj[:n_pos]                                                 # (L*B, Dp)
    neg = proj[n_pos:].reshape(num_levels * b, NUM_ANCHORS, PROJ_PAD)  # (L*B, A, Dp)

    # Replicates the level-major / batch-minor stack + view quirk of the reference.
    z_j = pos.reshape(b, -1, PROJ_PAD).mean(axis=1)                    # (B, Dp)
    z_a = neg.reshape(b, -1, NUM_ANCHORS, PROJ_PAD).mean(axis=1)       # (B, A, Dp)
    return z_j, z_a


def unsupervised_detector_forward(batch, params, key):
    """Training-mode forward: returns {'loss', 'similarity_map'}."""
    x_i = batch['image_crop']          # (B, 3, Hc, Wc)  NCHW
    x_j = batch['image_original']      # (B, 3, H, W)    NCHW
    crop_coords = batch['crop_coords'] # (B, 4) = [y, x, h, w]

    z_i = pipeline1_resnet_encoder(x_i, params)                        # (B, PROJ_PAD)
    z_j, z_a = pipeline2_fpn_encoder(x_j, crop_coords, params, key)

    loss, sim_pad = pallas_loss_and_sim(z_i, z_j, z_a, TEMPERATURE)
    # Padded columns of sim_pad are exactly zero; slice back to PROJ_DIM.
    return {'loss': loss, 'similarity_map': sim_pad[:, :PROJ_DIM]}


# ============================ deterministic params ===========================

def init_params(key):
    ks = jax.random.split(key, 8)

    def w(k, shape, scale):
        return jax.random.normal(k, shape, jnp.float32) * scale

    def pad_cols(m):
        # Zero-pad the PROJ_DIM output to a lane-dense PROJ_PAD slab (exact).
        return jnp.pad(m, ((0, 0), (0, PROJ_PAD - PROJ_DIM)))

    # ---- raw module-equivalent parameters (f32) -----------------------------
    # pipeline1 stand-in stem (-> 2048 channels) + projection MLP
    p1_stem_w = w(ks[0], (3, 2048), 0.20)
    p1_stem_b = jnp.zeros((1, 2048), jnp.float32)
    p1_fc1_w = w(ks[1], (2048, 512), 0.02)                 # Linear(2048, 512)
    p1_fc1_b = jnp.zeros((1, 512), jnp.float32)
    p1_fc2_w = pad_cols(w(ks[2], (512, PROJ_DIM), 0.05))   # Linear(512, D), padded
    p1_fc2_b = jnp.zeros((1, PROJ_PAD), jnp.float32)
    # FPN stand-in stem (-> 256 channels) + proj_head (1x1 convs)
    fpn_stem_w = w(ks[3], (3, 256), 0.20)
    fpn_stem_b = jnp.zeros((1, 256), jnp.float32)
    head_w1 = w(ks[4], (256, 512), 0.05)                   # Conv2d(256, 512, 1)
    head_b1 = jnp.zeros((1, 512), jnp.float32)
    head_w2 = pad_cols(w(ks[5], (512, PROJ_DIM), 0.05))    # Conv2d(512, D, 1), padded
    head_b2 = jnp.zeros((1, PROJ_PAD), jnp.float32)

    # ---- fold the linear stand-in stems into the first Linear ---------------
    # NOTE: exact only while the stem is a linear stand-in for the backbone.
    def fold(stem_w, stem_b, w1, b1):
        wc = stem_w @ w1                                   # (3, 512)
        bc = stem_b @ w1 + b1                              # (1, 512)
        wc = jnp.pad(wc, ((0, 8 - wc.shape[0]), (0, 0)))   # pad K 3 -> 8 (zeros)
        return wc.astype(jnp.bfloat16), bc                 # bf16 weights, f32 bias

    p1_w1, p1_b1 = fold(p1_stem_w, p1_stem_b, p1_fc1_w, p1_fc1_b)
    fpn_w1, fpn_b1 = fold(fpn_stem_w, fpn_stem_b, head_w1, head_b1)

    return {
        'p1_w1': p1_w1, 'p1_b1': p1_b1,
        'p1_w2': p1_fc2_w.astype(jnp.bfloat16), 'p1_b2': p1_fc2_b,
        'fpn_w1': fpn_w1, 'fpn_b1': fpn_b1,
        'fpn_w2': head_w2.astype(jnp.bfloat16), 'fpn_b2': head_b2,
    }


# ==================================== main ===================================

if __name__ == "__main__":
    key = jax.random.PRNGKey(0)
    k_param, k_xi, k_xj, k_neg = jax.random.split(key, 4)

    params = init_params(k_param)

    batch_size = 2
    batch = {
        'image_crop': jax.random.normal(k_xi, (batch_size, 3, 16, 16), jnp.float32),
        'image_original': jax.random.normal(k_xj, (batch_size, 3, 32, 32), jnp.float32),
        'crop_coords': jnp.array([[4.0, 6.0, 10.0, 12.0],
                                  [8.0, 2.0, 12.0, 8.0]], jnp.float32),  # [y, x, h, w]
    }

    forward = jax.jit(unsupervised_detector_forward)
    out = forward(batch, params, k_neg)
    jax.block_until_ready(out['loss'])
    jax.block_until_ready(out['similarity_map'])

    assert out['loss'].shape == ()
    assert out['similarity_map'].shape == (batch_size, PROJ_DIM)
    assert bool(jnp.isfinite(out['loss']))
    print("KERNEL_OK")
</pallas_src>

<mosaic_0001>
module attributes {stable_mosaic.version = 11 : i64} {
  func.func @_fused_mlp_kernel(%arg0: memref<66x8xf32, #tpu.memory_space<vmem>>, %arg1: memref<8x512xbf16, #tpu.memory_space<vmem>>, %arg2: memref<1x512xf32, #tpu.memory_space<vmem>>, %arg3: memref<512x128xbf16, #tpu.memory_space<vmem>>, %arg4: memref<1x128xf32, #tpu.memory_space<vmem>>, %arg5: memref<66x128xf32, #tpu.memory_space<vmem>>) attributes {dimension_semantics = [], scalar_prefetch = 0 : i64, scratch_operands = 0 : i64, tpu.core_type = #tpu.core_type<tc>} {
    %c0 = arith.constant 0 : index
    %c0_0 = arith.constant 0 : index
    %0 = vector.load %arg0[%c0, %c0_0] : memref<66x8xf32, #tpu.memory_space<vmem>>, vector<66x8xf32>
    %1 = arith.truncf %0 : vector<66x8xf32> to vector<66x8xbf16>
    %c0_1 = arith.constant 0 : index
    %c0_2 = arith.constant 0 : index
    %2 = vector.load %arg1[%c0_1, %c0_2] : memref<8x512xbf16, #tpu.memory_space<vmem>>, vector<8x512xbf16>
    %cst = arith.constant dense<0.000000e+00> : vector<66x512xf32>
    %3 = tpu.matmul %1, %2, %cst {dimension_numbers = #tpu.dot_dimension_numbers<[1], [0], [0], [1], [0, 0, 1, 1], [], []>} : vector<66x8xbf16>, vector<8x512xbf16>, vector<66x512xf32> -> vector<66x512xf32>
    %c0_3 = arith.constant 0 : index
    %c0_4 = arith.constant 0 : index
    %4 = vector.load %arg2[%c0_3, %c0_4] : memref<1x512xf32, #tpu.memory_space<vmem>>, vector<1x512xf32>
    %5 = vector.broadcast %4 : vector<1x512xf32> to vector<66x512xf32>
    %6 = arith.addf %3, %5 : vector<66x512xf32>
    %cst_5 = arith.constant 0.000000e+00 : f32
    %7 = vector.broadcast %cst_5 : f32 to vector<66x512xf32>
    %8 = arith.maximumf %6, %7 : vector<66x512xf32>
    %9 = arith.truncf %8 : vector<66x512xf32> to vector<66x512xbf16>
    %c0_6 = arith.constant 0 : index
    %c0_7 = arith.constant 0 : index
    %10 = vector.load %arg3[%c0_6, %c0_7] : memref<512x128xbf16, #tpu.memory_space<vmem>>, vector<512x128xbf16>
    %cst_8 = arith.constant dense<0.000000e+00> : vector<66x128xf32>
    %11 = tpu.matmul %9, %10, %cst_8 {dimension_numbers = #tpu.dot_dimension_numbers<[1], [0], [0], [1], [0, 0, 1, 1], [], []>} : vector<66x512xbf16>, vector<512x128xbf16>, vector<66x128xf32> -> vector<66x128xf32>
    %c0_9 = arith.constant 0 : index
    %c0_10 = arith.constant 0 : index
    %12 = vector.load %arg4[%c0_9, %c0_10] : memref<1x128xf32, #tpu.memory_space<vmem>>, vector<1x128xf32>
    %13 = vector.broadcast %12 : vector<1x128xf32> to vector<66x128xf32>
    %14 = arith.addf %11, %13 : vector<66x128xf32>
    %c0_11 = arith.constant 0 : index
    %c0_12 = arith.constant 0 : index
    %15 = vector.load %arg5[%c0_11, %c0_12] : memref<66x128xf32, #tpu.memory_space<vmem>>, vector<66x128xf32>
    tpu.vector_store %arg5[%c0_11, %c0_12], %14 {strides = array<i32>} : memref<66x128xf32, #tpu.memory_space<vmem>>, vector<66x128xf32>,
    return
  }
}

module attributes {stable_mosaic.version = 11 : i64} {
  func.func @_fused_mlp_kernel(%arg0: memref<2x8xf32, #tpu.memory_space<vmem>>, %arg1: memref<8x512xbf16, #tpu.memory_space<vmem>>, %arg2: memref<1x512xf32, #tpu.memory_space<vmem>>, %arg3: memref<512x128xbf16, #tpu.memory_space<vmem>>, %arg4: memref<1x128xf32, #tpu.memory_space<vmem>>, %arg5: memref<2x128xf32, #tpu.memory_space<vmem>>) attributes {dimension_semantics = [], scalar_prefetch = 0 : i64, scratch_operands = 0 : i64, tpu.core_type = #tpu.core_type<tc>} {
    %c0 = arith.constant 0 : index
    %c0_0 = arith.constant 0 : index
    %0 = vector.load %arg0[%c0, %c0_0] : memref<2x8xf32, #tpu.memory_space<vmem>>, vector<2x8xf32>
    %1 = arith.truncf %0 : vector<2x8xf32> to vector<2x8xbf16>
    %c0_1 = arith.constant 0 : index
    %c0_2 = arith.constant 0 : index
    %2 = vector.load %arg1[%c0_1, %c0_2] : memref<8x512xbf16, #tpu.memory_space<vmem>>, vector<8x512xbf16>
    %cst = arith.constant dense<0.000000e+00> : vector<2x512xf32>
    %3 = tpu.matmul %1, %2, %cst {dimension_numbers = #tpu.dot_dimension_numbers<[1], [0], [0], [1], [0, 0, 1, 1], [], []>} : vector<2x8xbf16>, vector<8x512xbf16>, vector<2x512xf32> -> vector<2x512xf32>
    %c0_3 = arith.constant 0 : index
    %c0_4 = arith.constant 0 : index
    %4 = vector.load %arg2[%c0_3, %c0_4] : memref<1x512xf32, #tpu.memory_space<vmem>>, vector<1x512xf32>
    %5 = vector.broadcast %4 : vector<1x512xf32> to vector<2x512xf32>
    %6 = arith.addf %3, %5 : vector<2x512xf32>
    %cst_5 = arith.constant 0.000000e+00 : f32
    %7 = vector.broadcast %cst_5 : f32 to vector<2x512xf32>
    %8 = arith.maximumf %6, %7 : vector<2x512xf32>
    %9 = arith.truncf %8 : vector<2x512xf32> to vector<2x512xbf16>
    %c0_6 = arith.constant 0 : index
    %c0_7 = arith.constant 0 : index
    %10 = vector.load %arg3[%c0_6, %c0_7] : memref<512x128xbf16, #tpu.memory_space<vmem>>, vector<512x128xbf16>
    %cst_8 = arith.constant dense<0.000000e+00> : vector<2x128xf32>
    %11 = tpu.matmul %9, %10, %cst_8 {dimension_numbers = #tpu.dot_dimension_numbers<[1], [0], [0], [1], [0, 0, 1, 1], [], []>} : vector<2x512xbf16>, vector<512x128xbf16>, vector<2x128xf32> -> vector<2x128xf32>
    %c0_9 = arith.constant 0 : index
    %c0_10 = arith.constant 0 : index
    %12 = vector.load %arg4[%c0_9, %c0_10] : memref<1x128xf32, #tpu.memory_space<vmem>>, vector<1x128xf32>
    %13 = vector.broadcast %12 : vector<1x128xf32> to vector<2x128xf32>
    %14 = arith.addf %11, %13 : vector<2x128xf32>
    %c0_11 = arith.constant 0 : index
    %c0_12 = arith.constant 0 : index
    %15 = vector.load %arg5[%c0_11, %c0_12] : memref<2x128xf32, #tpu.memory_space<vmem>>, vector<2x128xf32>
    tpu.vector_store %arg5[%c0_11, %c0_12], %14 {strides = array<i32>} : memref<2x128xf32, #tpu.memory_space<vmem>>, vector<2x128xf32>,
    return
  }
}

module attributes {stable_mosaic.version = 11 : i64} {
  func.func @_loss_sim_kernel(%arg0: memref<2x128xf32, #tpu.memory_space<vmem>>, %arg1: memref<2x128xf32, #tpu.memory_space<vmem>>, %arg2: memref<2x10x128xf32, #tpu.memory_space<vmem>>, %arg3: memref<1x1xf32, #tpu.memory_space<smem>>, %arg4: memref<2x128xf32, #tpu.memory_space<vmem>>) attributes {dimension_semantics = [], scalar_prefetch = 0 : i64, scratch_operands = 0 : i64, tpu.core_type = #tpu.core_type<tc>} {
    %c0 = arith.constant 0 : index
    %c0_0 = arith.constant 0 : index
    %0 = vector.load %arg0[%c0, %c0_0] : memref<2x128xf32, #tpu.memory_space<vmem>>, vector<2x128xf32>
    %c0_1 = arith.constant 0 : index
    %c0_2 = arith.constant 0 : index
    %1 = vector.load %arg1[%c0_1, %c0_2] : memref<2x128xf32, #tpu.memory_space<vmem>>, vector<2x128xf32>
    %c0_3 = arith.constant 0 : index
    %c0_4 = arith.constant 0 : index
    %c0_5 = arith.constant 0 : index
    %2 = vector.load %arg2[%c0_3, %c0_4, %c0_5] : memref<2x10x128xf32, #tpu.memory_space<vmem>>, vector<2x10x128xf32>
    %3 = arith.mulf %0, %0 : vector<2x128xf32>
    %cst = arith.constant dense<0.000000e+00> : vector<2xf32>
    %4 = vector.multi_reduction <add>, %3, %cst [1] : vector<2x128xf32> to vector<2xf32>
    %5 = vector.shape_cast %4 : vector<2xf32> to vector<2x1xf32>
    %cst_6 = arith.constant 1.000000e-24 : f32
    %6 = vector.broadcast %cst_6 : f32 to vector<2x1xf32>
    %7 = arith.maximumf %5, %6 : vector<2x1xf32>
    %8 = math.rsqrt %7 : vector<2x1xf32>
    %9 = vector.broadcast %8 : vector<2x1xf32> to vector<2x128xf32>
    %10 = arith.mulf %0, %9 : vector<2x128xf32>
    %11 = arith.mulf %1, %1 : vector<2x128xf32>
    %cst_7 = arith.constant dense<0.000000e+00> : vector<2xf32>
    %12 = vector.multi_reduction <add>, %11, %cst_7 [1] : vector<2x128xf32> to vector<2xf32>
    %13 = vector.shape_cast %12 : vector<2xf32> to vector<2x1xf32>
    %cst_8 = arith.constant 1.000000e-24 : f32
    %14 = vector.broadcast %cst_8 : f32 to vector<2x1xf32>
    %15 = arith.maximumf %13, %14 : vector<2x1xf32>
    %16 = math.rsqrt %15 : vector<2x1xf32>
    %17 = vector.broadcast %16 : vector<2x1xf32> to vector<2x128xf32>
    %18 = arith.mulf %1, %17 : vector<2x128xf32>
    %19 = arith.mulf %2, %2 : vector<2x10x128xf32>
    %cst_9 = arith.constant dense<0.000000e+00> : vector<2x10xf32>
    %20 = vector.multi_reduction <add>, %19, %cst_9 [2] : vector<2x10x128xf32> to vector<2x10xf32>
    %21 = vector.shape_cast %20 : vector<2x10xf32> to vector<2x10x1xf32>
    %cst_10 = arith.constant 1.000000e-24 : f32
    %22 = vector.broadcast %cst_10 : f32 to vector<2x10x1xf32>
    %23 = arith.maximumf %21, %22 : vector<2x10x1xf32>
    %24 = math.rsqrt %23 : vector<2x10x1xf32>
    %25 = vector.broadcast %24 : vector<2x10x1xf32> to vector<2x10x128xf32>
    %26 = arith.mulf %2, %25 : vector<2x10x128xf32>
    %cst_11 = arith.constant dense<0.000000e+00> : vector<2xf32>
    %27 = vector.multi_reduction <add>, %10, %cst_11 [1] : vector<2x128xf32> to vector<2xf32>
    %28 = vector.shape_cast %27 : vector<2xf32> to vector<2x1xf32>
    %29 = vector.broadcast %28 : vector<2x1xf32> to vector<2x128xf32>
    %30 = arith.mulf %29, %18 : vector<2x128xf32>
    %c0_12 = arith.constant 0 : index
    %c0_13 = arith.constant 0 : index
    %31 = vector.load %arg4[%c0_12, %c0_13] : memref<2x128xf32, #tpu.memory_space<vmem>>, vector<2x128xf32>
    tpu.vector_store %arg4[%c0_12, %c0_13], %30 {strides = array<i32>} : memref<2x128xf32, #tpu.memory_space<vmem>>, vector<2x128xf32>,
    %32 = tpu.iota {dimensions = array<i32: 0>} : vector<2x2xi32>
    %33 = tpu.iota {dimensions = array<i32: 1>} : vector<2x2xi32>
    %34 = arith.cmpi eq, %32, %33 : vector<2x2xi32>
    %35 = arith.mulf %10, %18 : vector<2x128xf32>
    %cst_14 = arith.constant dense<0.000000e+00> : vector<2xf32>
    %36 = vector.multi_reduction <add>, %35, %cst_14 [1] : vector<2x128xf32> to vector<2xf32>
    %37 = vector.shape_cast %36 : vector<2xf32> to vector<2x1xf32>
    %cst_15 = arith.constant dense<0.000000e+00> : vector<2x2xf32>
    %38 = tpu.matmul %10, %18, %cst_15 {dimension_numbers = #tpu.dot_dimension_numbers<[1], [1], [0], [0], [0, 0, 1, 0], [], []>} : vector<2x128xf32>, vector<2x128xf32>, vector<2x2xf32> -> vector<2x2xf32>
    %39 = vector.shape_cast %10 : vector<2x128xf32> to vector<2x1x128xf32>
    %40 = vector.broadcast %39 : vector<2x1x128xf32> to vector<2x10x128xf32>
    %41 = arith.mulf %40, %26 : vector<2x10x128xf32>
    %cst_16 = arith.constant dense<0.000000e+00> : vector<2x10xf32>
    %42 = vector.multi_reduction <add>, %41, %cst_16 [2] : vector<2x10x128xf32> to vector<2x10xf32>
    %cst_17 = arith.constant 5.000000e-01 : f32
    %43 = vector.broadcast %cst_17 : f32 to vector<2x1xf32>
    %44 = arith.divf %37, %43 : vector<2x1xf32>
    %cst_18 = arith.constant 5.000000e-01 : f32
    %45 = vector.broadcast %cst_18 : f32 to vector<2x2xf32>
    %46 = arith.divf %38, %45 : vector<2x2xf32>
    %cst_19 = arith.constant 5.000000e-01 : f32
    %47 = vector.broadcast %cst_19 : f32 to vector<2x10xf32>
    %48 = arith.divf %42, %47 : vector<2x10xf32>
    %cst_20 = arith.constant -1.000000e+30 : f32
    %49 = vector.broadcast %cst_20 : f32 to vector<2x2xf32>
    %50 = arith.select %34, %49, %46 : vector<2x2xi1>, vector<2x2xf32>
    %cst_21 = arith.constant dense<0xFF800000> : vector<2xf32>
    %51 = vector.multi_reduction <maximumf>, %50, %cst_21 [1] : vector<2x2xf32> to vector<2xf32>
    %52 = vector.shape_cast %51 : vector<2xf32> to vector<2x1xf32>
    %53 = arith.maximumf %44, %52 : vector<2x1xf32>
    %cst_22 = arith.constant dense<0xFF800000> : vector<2xf32>
    %54 = vector.multi_reduction <maximumf>, %48, %cst_22 [1] : vector<2x10xf32> to vector<2xf32>
    %55 = vector.shape_cast %54 : vector<2xf32> to vector<2x1xf32>
    %56 = arith.maximumf %53, %55 : vector<2x1xf32>
    %57 = arith.subf %44, %56 : vector<2x1xf32>
    %58 = math.exp %57 : vector<2x1xf32>
    %59 = vector.broadcast %56 : vector<2x1xf32> to vector<2x2xf32>
    %60 = arith.subf %50, %59 : vector<2x2xf32>
    %61 = math.exp %60 : vector<2x2xf32>
    %cst_23 = arith.constant 0.000000e+00 : f32
    %62 = vector.broadcast %cst_23 : f32 to vector<2x2xf32>
    %63 = arith.select %34, %62, %61 : vector<2x2xi1>, vector<2x2xf32>
    %64 = vector.broadcast %56 : vector<2x1xf32> to vector<2x10xf32>
    %65 = arith.subf %48, %64 : vector<2x10xf32>
    %66 = math.exp %65 : vector<2x10xf32>
    %cst_24 = arith.constant dense<0.000000e+00> : vector<2xf32>
    %67 = vector.multi_reduction <add>, %63, %cst_24 [1] : vector<2x2xf32> to vector<2xf32>
    %68 = vector.shape_cast %67 : vector<2xf32> to vector<2x1xf32>
    %69 = arith.addf %58, %68 : vector<2x1xf32>
    %cst_25 = arith.constant dense<0.000000e+00> : vector<2xf32>
    %70 = vector.multi_reduction <add>, %66, %cst_25 [1] : vector<2x10xf32> to vector<2xf32>
    %71 = vector.shape_cast %70 : vector<2xf32> to vector<2x1xf32>
    %72 = arith.addf %69, %71 : vector<2x1xf32>
    %73 = math.log %72 : vector<2x1xf32>
    %74 = arith.addf %56, %73 : vector<2x1xf32>
    %75 = arith.subf %74, %44 : vector<2x1xf32>
    %76 = vector.shape_cast %75 : vector<2x1xf32> to vector<1x2x1xf32>
    %cst_26 = arith.constant dense<0.000000e+00> : vector<1xf32>
    %77 = vector.multi_reduction <add>, %76, %cst_26 [1, 2] : vector<1x2x1xf32> to vector<1xf32>
    %78 = vector.shape_cast %77 : vector<1xf32> to vector<1x1x1xf32>
    %79 = vector.extract %78[0, 0, 0] : f32 from vector<1x1x1xf32>
    %cst_27 = arith.constant 2.000000e+00 : f32
    %80 = arith.divf %79, %cst_27 : f32
    %c0_28 = arith.constant 0 : index
    %c0_29 = arith.constant 0 : index
    %81 = memref.load %arg3[%c0_28, %c0_29] : memref<1x1xf32, #tpu.memory_space<smem>>
    memref.store %80, %arg3[%c0_28, %c0_29] : memref<1x1xf32, #tpu.memory_space<smem>>
    return
  }
}

</mosaic_0001>

<llo_original>
// kernel: unsupervised_detector_forward.5
$region0: #{unsupervised_detector_forward.5}
  #allocation0 [shape = 'u32[]', space=smem, size = 0x4, offset = 0x4, fixed_abs, tag = 'smem constant byte address 0x4 - core index']
  #allocation1 [shape = 'u32[72,128]{1,0:T(1,128)}', space=vmem, size = 0x9000, scoped, tag = 'internal scratch']
  %s0 = inlined_call_operand.vmem [shape: f32[2,128], index: 0, kind: input, shape index: {}]
  %s1 = inlined_call_operand.vmem [shape: f32[2,128], index: 1, kind: input, shape index: {}]
  %s2 = inlined_call_operand.vmem [shape: f32[2,10,128], index: 2, kind: input, shape index: {}]
  %s3 = inlined_call_operand.hbm [shape: f32[1,1], index: 3, kind: output, shape index: {0}]
  %s4 = inlined_call_operand.hbm [shape: f32[2,128], index: 4, kind: output, shape index: {1}]
  %5 = xla_tuple %s3, %s4
  %s6 = sld [smem:[#allocation0]]
  $region30: #{unsupervised_detector_forward.5} parent=0
    _
  %s8 = ssub.s32 1, %s6
  %s9 = scalar_select 0, %s8, %s6
  $region1: #{unsupervised_detector_forward.5} parent=0
    #allocation2 [shape = 'u8[512]{0}', space=smem, size = 0x200, scoped, tag = 'output window, operand 0, single buffered']
    #allocation3 [shape = 's32[1]{0}', space=sflag, size = 0x4, scoped, tag = 'scoped memory for unsupervised_detector_forward.5']
    #allocation4 [shape = 's32[1]{0}', space=sflag, size = 0x4, scoped, tag = 'scoped memory for unsupervised_detector_forward.5']
    #allocation5 [shape = 'u8[1024]{0}', space=vmem, size = 0x400, scoped, tag = 'output window, operand 1, single buffered']
    %10 = vsyncpa [#allocation4], 0
    %11 = vsyncpa [#allocation3], 0
    // Predicated region
    $region2: #{unsupervised_detector_forward.5} parent=1 // pred_check
      _
    $region3: #{unsupervised_detector_forward.5} parent=1 // pred_check_branch
      %13 = sbr.rel (0) target = $region5
    $region4: #{unsupervised_detector_forward.5} parent=1 // pred_region
      _
    $region5: #{unsupervised_detector_forward.5} parent=1 // pred_fallthru
      _
    // Predicated region
    $region6: #{unsupervised_detector_forward.5} parent=1 // pred_check
      _
    $region7: #{unsupervised_detector_forward.5} parent=1 // pred_check_branch
      %15 = sbr.rel (0) target = $region9
    $region8: #{unsupervised_detector_forward.5} parent=1 // pred_region
      _
    $region9: #{unsupervised_detector_forward.5} parent=1 // pred_fallthru
      _
    // Predicated region
    $region10: #{unsupervised_detector_forward.5} parent=1 // pred_check
      _
    $region11: #{unsupervised_detector_forward.5} parent=1 // pred_check_branch
      %17 = sbr.rel (0) target = $region13
    $region12: #{unsupervised_detector_forward.5} parent=1 // pred_region
      _
    $region13: #{unsupervised_detector_forward.5} parent=1 // pred_fallthru
      _
    %v18 = vld [vmem:[%s0] sm:$0x3]
    %v19 = vld [vmem:[%s1] sm:$0x3]
    %v20 = vld [vmem:[%s2] sm:$0xff]
    %v21 = vld [vmem:[%s2 + $0x8] sm:$0x3]
    %v22 = vld [vmem:[%s2 + $0x10] sm:$0xff]
    %v23 = vld [vmem:[%s2 + $0x18] sm:$0x3]
    %v24 = vmul.f32 %v18, %v18
    %vm25 = vcmask 1041408
    %v26 = vsel %vm25, %v24, 0.0
    %27 = vadd.xlane.f32.xlu0 %v26
    %v28 = vpop.xlane.xlu0 %27
    %v29 = vmax.f32 %v28, 1e-24
    %v30 = vrsqrt.pop %v29
    %v31 = vmul.f32 %v30, %v29
    %v32 = vmul.f32 %v31, %v30
    %v33 = vmul.f32 0.5, %v32
    %v34 = vsub.f32 1.5, %v33
    %v35 = vmul.f32 %v30, %v34
    %vm36 = vweird.f32 %v29
    %vm37 = vweird.f32 %v30
    %vm38 = vmor %vm36, %vm37
    %v39 = vsel %vm38, %v30, %v35
    %v40 = vmul.f32 %v18, %v39
    %v41 = vmul.f32 %v19, %v19
    %v42 = vsel %vm25, %v41, 0.0
    %43 = vadd.xlane.f32.xlu0 %v42
    %v44 = vpop.xlane.xlu0 %43
    %v45 = vmax.f32 %v44, 1e-24
    %v46 = vrsqrt.pop %v45
    %v47 = vmul.f32 %v46, %v45
    %v48 = vmul.f32 %v47, %v46
    %v49 = vmul.f32 0.5, %v48
    %v50 = vsub.f32 1.5, %v49
    %v51 = vmul.f32 %v46, %v50
    %vm52 = vweird.f32 %v45
    %vm53 = vweird.f32 %v46
    %vm54 = vmor %vm52, %vm53
    %v55 = vsel %vm54, %v46, %v51
    %v56 = vmul.f32 %v19, %v55
    %v57 = vmul.f32 %v20, %v20
    %v58 = vmul.f32 %v21, %v21
    %v59 = vmul.f32 %v22, %v22
    %v60 = vmul.f32 %v23, %v23
    %61 = vadd.xlane.f32.xlu0 %v57
    %v62 = vpop.xlane.xlu0 %61
    %v63 = vsel %vm25, %v58, 0.0
    %64 = vadd.xlane.f32.xlu0 %v63
    %v65 = vpop.xlane.xlu0 %64
    %66 = vadd.xlane.f32.xlu0 %v59
    %v67 = vpop.xlane.xlu0 %66
    %v68 = vsel %vm25, %v60, 0.0
    %69 = vadd.xlane.f32.xlu0 %v68
    %v70 = vpop.xlane.xlu0 %69
    %v71 = vmax.f32 %v62, 1e-24
    %v72 = vmax.f32 %v65, 1e-24
    %v73 = vmax.f32 %v67, 1e-24
    %v74 = vmax.f32 %v70, 1e-24
    %v75 = vrsqrt.pop %v71
    %v76 = vmul.f32 %v75, %v71
    %v77 = vmul.f32 %v76, %v75
    %v78 = vmul.f32 0.5, %v77
    %v79 = vsub.f32 1.5, %v78
    %v80 = vmul.f32 %v75, %v79
    %vm81 = vweird.f32 %v71
    %vm82 = vweird.f32 %v75
    %vm83 = vmor %vm81, %vm82
    %v84 = vsel %vm83, %v75, %v80
    %v85 = vrsqrt.pop %v72
    %v86 = vmul.f32 %v85, %v72
    %v87 = vmul.f32 %v86, %v85
    %v88 = vmul.f32 0.5, %v87
    %v89 = vsub.f32 1.5, %v88
    %v90 = vmul.f32 %v85, %v89
    %vm91 = vweird.f32 %v72
    %vm92 = vweird.f32 %v85
    %vm93 = vmor %vm91, %vm92
    %v94 = vsel %vm93, %v85, %v90
    %v95 = vrsqrt.pop %v73
    %v96 = vmul.f32 %v95, %v73
    %v97 = vmul.f32 %v96, %v95
    %v98 = vmul.f32 0.5, %v97
    %v99 = vsub.f32 1.5, %v98
    %v100 = vmul.f32 %v95, %v99
    %vm101 = vweird.f32 %v73
    %vm102 = vweird.f32 %v95
    %vm103 = vmor %vm101, %vm102
    %v104 = vsel %vm103, %v95, %v100
    %v105 = vrsqrt.pop %v74
    %v106 = vmul.f32 %v105, %v74
    %v107 = vmul.f32 %v106, %v105
    %v108 = vmul.f32 0.5, %v107
    %v109 = vsub.f32 1.5, %v108
    %v110 = vmul.f32 %v105, %v109
    %vm111 = vweird.f32 %v74
    %vm112 = vweird.f32 %v105
    %vm113 = vmor %vm111, %vm112
    %v114 = vsel %vm113, %v105, %v110
    %v115 = vmul.f32 %v20, %v84
    %v116 = vmul.f32 %v21, %v94
    %v117 = vmul.f32 %v22, %v104
    %v118 = vmul.f32 %v23, %v114
    %v119 = vsel %vm25, %v40, 0.0
    %120 = vadd.xlane.f32.xlu0 %v119
    %v121 = vpop.xlane.xlu0 %120
    %v122 = vmul.f32 %v121, %v56
    %123 = vst [vmem:[#allocation5] sm:$0x3] %v122
    %v124 = vlaneseq
    %v125 = vshrl.u32 %v124, 7
    %v126 = vlaneseq
    %v127 = vand.u32 %v126, 127
    %vm128 = vcmp.eq.s32.totalorder %v125, %v127
    %v129 = vmul.f32 %v40, %v56
    %v130 = vsel %vm25, %v129, 0.0
    %131 = vadd.xlane.f32.xlu0 %v130
    %v132 = vpop.xlane.xlu0 %131
    %133 = vmatpush.xpose.msra.mxu0 0.0
    %134 = vmatpush.xpose.msra.mxu0 0.0
    %135 = vmatpush.xpose.msra.mxu0 0.0
    %136 = vmatpush.xpose.msra.mxu0 0.0
    %137 = vmatpush.xpose.msra.mxu0 0.0
    %138 = vmatpush.xpose.msra.mxu0 0.0
    %139 = vmatpush.xpose.msra.mxu0 0.0
    %140 = vmatpush.xpose.msra.mxu0 0.0
    %141 = vmatpush.xpose.msra.mxu0 0.0
    %142 = vmatpush.xpose.msra.mxu0 0.0
    %143 = vmatpush.xpose.msra.mxu0 0.0
    %144 = vmatpush.xpose.msra.mxu0 0.0
    %145 = vmatpush.xpose.msra.mxu0 0.0
    %146 = vmatpush.xpose.msra.mxu0 0.0
    %147 = vmatpush.xpose.msra.mxu0 0.0
    %148 = vmatpush.xpose.msra.mxu0 %v56
    %149 = vmatmul.f32.gmra.mxu0 %v40
    %v150 = vpop.f32.mrf.mxu0
    %v151 = vadd.f32 0.0, %v150
    %152 = vdwg.mxu0
    %v154 = vrot.slane %v40, 1
    %v155 = vperm.slane %v40, 0
    %v156 = vperm.slane %v154, 0
    %v159 = vmul.f32 %v155, %v115
    %v160 = vmul.f32 %v155, %v116
    %v161 = vmul.f32 %v156, %v117
    %v162 = vmul.f32 %v156, %v118
    %163 = vadd.xlane.f32.xlu0 %v159
    %v164 = vpop.xlane.xlu0 %163
    %v165 = vsel %vm25, %v160, 0.0
    %166 = vadd.xlane.f32.xlu0 %v165
    %v167 = vpop.xlane.xlu0 %166
    %168 = vadd.xlane.f32.xlu0 %v161
    %v169 = vpop.xlane.xlu0 %168
    %v170 = vsel %vm25, %v162, 0.0
    %171 = vadd.xlane.f32.xlu0 %v170
    %v172 = vpop.xlane.xlu0 %171
    %v173 = vrcp.pop 0.5
    %v174 = vmul.f32 0.5, %v173
    %v175 = vsub.f32 1.0, %v174
    %v176 = vmul.f32 %v173, %v175
    %v177 = vadd.f32 %v173, %v176
    %vm178 = vweird.f32 %v173
    %v179 = vsel %vm178, %v173, %v177
    %v180 = vmul.f32 %v132, %v179
    %v181 = vmul.f32 %v151, %v179
    %v182 = vmul.f32 %v164, %v179
    %v183 = vmul.f32 %v167, %v179
    %v184 = vmul.f32 %v169, %v179
    %v185 = vmul.f32 %v172, %v179
    %v186 = vsel %vm128, -1e+30, %v181
    %vm187 = vcmask 9216
    %v188 = vsel %vm187, %v186, -inf
    %189 = vmax.xlane.f32.xlu0 %v188
    %v190 = vpop.xlane.xlu0 %189
    %v191 = vmax.f32 %v180, %v190
    %v196 = vperm.slane %v182, %v127
    %v197 = vadd.s32 %v127, 4294967288
    %v198 = vperm.slane %v183, %v197
    %vm199 = vcmask 130112
    %v200 = vsel %vm199, %v198, %v196
    %v201 = vperm.slane %v184, %v127
    %v202 = vperm.slane %v185, %v197
    %v203 = vsel %vm199, %v202, %v201
    %vm204 = vcmask 1041409
    %v205 = vsel %vm204, %v203, %v200
    %vm207 = vcmask 74752
    %v208 = vsel %vm207, %v205, -inf
    %209 = vmax.xlane.f32.xlu0 %v208
    %v210 = vpop.xlane.xlu0 %209
    %v211 = vmax.f32 %v191, %v210
    %v212 = vsub.f32 %v180, %v211
    %v213 = vmul.f32 %v212, 1.442695
    %v214 = vpow.pop %v213
    %v215 = vsub.f32 %v186, %v211
    %v216 = vmul.f32 %v215, 1.442695
    %v217 = vpow.pop %v216
    %v218 = vsel %vm128, 0.0, %v217
    %v220 = vperm.slane %v211, 0
    %v221 = vperm.slane %v211, 1
    %v224 = vsub.f32 %v182, %v220
    %v225 = vsub.f32 %v183, %v220
    %v226 = vsub.f32 %v184, %v221
    %v227 = vsub.f32 %v185, %v221
    %v228 = vmul.f32 %v224, 1.442695
    %v229 = vpow.pop %v228
    %v230 = vmul.f32 %v225, 1.442695
    %v231 = vpow.pop %v230
    %v232 = vmul.f32 %v226, 1.442695
    %v233 = vpow.pop %v232
    %v234 = vmul.f32 %v227, 1.442695
    %v235 = vpow.pop %v234
    %v236 = vsel %vm187, %v218, 0.0
    %237 = vadd.xlane.f32.xlu0 %v236
    %v238 = vpop.xlane.xlu0 %237
    %v239 = vadd.f32 %v214, %v238
    %244 = vset.pattern.permute.xlu0 0
    %245 = vperm.xlu0 %244, %v229
    %v246 = vpop.permute.xlu0 %245
    %247 = vset.pattern.permute.xlu0 0
    %248 = vperm.xlu0 %247, %v231
    %v249 = vpop.permute.xlu0 %248
    %250 = vset.pattern.permute.xlu0 0
    %251 = vperm.xlu0 %250, %v233
    %v252 = vpop.permute.xlu0 %251
    %253 = vset.pattern.permute.xlu0 0
    %254 = vperm.xlu0 %253, %v235
    %v255 = vpop.permute.xlu0 %254
    %v256 = vperm.slane %v246, %v127
    %v257 = vperm.slane %v249, %v197
    %v258 = vsel %vm199, %v257, %v256
    %v259 = vperm.slane %v252, %v127
    %v260 = vperm.slane %v255, %v197
    %v261 = vsel %vm199, %v260, %v259
    %v262 = vsel %vm204, %v261, %v258
    %v264 = vsel %vm207, %v262, 0.0
    %265 = vadd.xlane.f32.xlu0 %v264
    %v266 = vpop.xlane.xlu0 %265
    %v267 = vadd.f32 %v239, %v266
    %v268 = vlog2.pop %v267
    %v269 = vmul.f32 %v268, 0.6931472
    %v270 = vadd.f32 %v211, %v269
    %v271 = vsub.f32 %v270, %v180
    %vm272 = vcmask 1024
    %v273 = vsel %vm272, %v271, 0.0
    %274 = vadd.xlane.f32.xlu0 %v273
    %v275 = vpop.xlane.xlu0 %274
    %v276 = vrot.slane %v275, 4
    %v277 = vadd.f32 %v275, %v276
    %v278 = vrot.slane %v277, 2
    %v279 = vadd.f32 %v277, %v278
    %v280 = vrot.slane %v279, 1
    %v281 = vadd.f32 %v279, %v280
    %s282 = vtos %v281
    %v283 = vrcp.pop 2.0
    %v284 = vmul.f32 2.0, %v283
    %v285 = vsub.f32 1.0, %v284
    %v286 = vmul.f32 %v283, %v285
    %v287 = vadd.f32 %v283, %v286
    %vm288 = vweird.f32 %v283
    %v289 = vsel %vm288, %v283, %v287
    %s290 = vtos %v289
    %s291 = smul.f32 %s282, %s290
    %s292 = scalar_lea.smem [#allocation2], 0
    %293 = sst [smem:[%s292]] %s291
    // Predicated region
    $region14: #{unsupervised_detector_forward.5} parent=1 // pred_check
      _
    $region15: #{unsupervised_detector_forward.5} parent=1 // pred_check_branch
      %295 = sbr.rel (0) target = $region17
    $region16: #{unsupervised_detector_forward.5} parent=1 // pred_region
      %297 = vsyncadd [#allocation4], 0
      %s299 = sshll.u32 %s3, 4
      %s300 = int_to_ptr.hbm [resolvable:$true] %s299
      %302 = dma.smem_to_hbm [#allocation2], 16, %s300, [#allocation4]
    $region17: #{unsupervised_detector_forward.5} parent=1 // pred_fallthru
      _
    // Predicated region
    $region18: #{unsupervised_detector_forward.5} parent=1 // pred_check
      _
    $region19: #{unsupervised_detector_forward.5} parent=1 // pred_check_branch
      %304 = sbr.rel (0) target = $region21
    $region20: #{unsupervised_detector_forward.5} parent=1 // pred_region
      %306 = vsyncadd [#allocation3], 0
      %s308 = sshll.u32 [#allocation5], 4
      %s309 = int_to_ptr.vmem [resolvable:$true] %s308
      %s310 = sshll.u32 %s4, 4
      %s311 = int_to_ptr.hbm [resolvable:$true] %s310
      %313 = dma.vmem_to_hbm [thread:$0]  %s309, 32, %s311, [#allocation3]
    $region21: #{unsupervised_detector_forward.5} parent=1 // pred_fallthru
      _
    // Predicated region
    $region22: #{unsupervised_detector_forward.5} parent=1 // pred_check
      _
    $region23: #{unsupervised_detector_forward.5} parent=1 // pred_check_branch
      %315 = sbr.rel (0) target = $region25
    $region24: #{unsupervised_detector_forward.5} parent=1 // pred_region
      %317 = dma.done [#allocation4], 16
    $region25: #{unsupervised_detector_forward.5} parent=1 // pred_fallthru
      _
    // Predicated region
    $region26: #{unsupervised_detector_forward.5} parent=1 // pred_check
      _
    $region27: #{unsupervised_detector_forward.5} parent=1 // pred_check_branch
      %319 = sbr.rel (0) target = $region29
    $region28: #{unsupervised_detector_forward.5} parent=1 // pred_region
      %321 = dma.done [#allocation3], 32
    $region29: #{unsupervised_detector_forward.5} parent=1 // pred_fallthru
      _
    %322 = sfence
    %323 = vsyncpa [#allocation3], 1
    %324 = vsyncpa [#allocation4], 1

// kernel: unsupervised_detector_forward.3
$region0: #{unsupervised_detector_forward.3}
  #allocation0 [shape = 'u32[]', space=smem, size = 0x4, offset = 0x4, fixed_abs, tag = 'smem constant byte address 0x4 - core index']
  #allocation1 [shape = 'u32[72,128]{1,0:T(1,128)}', space=vmem, size = 0x9000, scoped, tag = 'internal scratch']
  %s0 = inlined_call_operand.vmem [shape: f32[2,8], index: 0, kind: input, shape index: {}]
  %s1 = inlined_call_operand.vmem [shape: bf16[8,512], index: 1, kind: input, shape index: {}]
  %s2 = inlined_call_operand.vmem [shape: f32[1,512], index: 2, kind: input, shape index: {}]
  %s3 = inlined_call_operand.vmem [shape: bf16[512,128], index: 3, kind: input, shape index: {}]
  %s4 = inlined_call_operand.vmem [shape: f32[1,128], index: 4, kind: input, shape index: {}]
  %s5 = inlined_call_operand.vmem [shape: f32[2,128], index: 5, kind: output, shape index: {}]
  %s6 = sld [smem:[#allocation0]]
  $region30: #{unsupervised_detector_forward.3} parent=0
    _
  %s8 = ssub.s32 1, %s6
  %s9 = scalar_select 0, %s8, %s6
  // Predicated region
  $region2: #{unsupervised_detector_forward.3} parent=0 // pred_check
    _
  $region3: #{unsupervised_detector_forward.3} parent=0 // pred_check_branch
    %11 = sbr.rel (0) target = $region5
  $region4: #{unsupervised_detector_forward.3} parent=0 // pred_region
    _
  $region5: #{unsupervised_detector_forward.3} parent=0 // pred_fallthru
    _
  // Predicated region
  $region6: #{unsupervised_detector_forward.3} parent=0 // pred_check
    _
  $region7: #{unsupervised_detector_forward.3} parent=0 // pred_check_branch
    %13 = sbr.rel (0) target = $region9
  $region8: #{unsupervised_detector_forward.3} parent=0 // pred_region
    _
  $region9: #{unsupervised_detector_forward.3} parent=0 // pred_fallthru
    _
  // Predicated region
  $region10: #{unsupervised_detector_forward.3} parent=0 // pred_check
    _
  $region11: #{unsupervised_detector_forward.3} parent=0 // pred_check_branch
    %15 = sbr.rel (0) target = $region13
  $region12: #{unsupervised_detector_forward.3} parent=0 // pred_region
    _
  $region13: #{unsupervised_detector_forward.3} parent=0 // pred_fallthru
    _
  // Predicated region
  $region14: #{unsupervised_detector_forward.3} parent=0 // pred_check
    _
  $region15: #{unsupervised_detector_forward.3} parent=0 // pred_check_branch
    %17 = sbr.rel (0) target = $region17
  $region16: #{unsupervised_detector_forward.3} parent=0 // pred_region
    _
  $region17: #{unsupervised_detector_forward.3} parent=0 // pred_fallthru
    _
  // Predicated region
  $region18: #{unsupervised_detector_forward.3} parent=0 // pred_check
    _
  $region19: #{unsupervised_detector_forward.3} parent=0 // pred_check_branch
    %19 = sbr.rel (0) target = $region21
  $region20: #{unsupervised_detector_forward.3} parent=0 // pred_region
    _
  $region21: #{unsupervised_detector_forward.3} parent=0 // pred_fallthru
    _
  %v21 = vld [vmem:[%s0] sm:$0x3]
  %v22 = vpack.c.bf16 %v21, %v21
  %v23 = vld [vmem:[%s1] sm:$0xff]
  %v24 = vld [vmem:[%s1 + $0x8] sm:$0xff]
  %v25 = vld [vmem:[%s2] sm:$0xf]
  %v27 = vperm.slane %v25, 0
  %v28 = vperm.slane %v25, 1
  %v29 = vperm.slane %v25, 2
  %v30 = vperm.slane %v25, 3
  %v37 = vunpack.c.l.b16 %v23
  %v38 = vunpack.c.h.b16 %v23
  %v39 = vunpack.c.l.b16 %v24
  %v40 = vunpack.c.h.b16 %v24
  %v41 = vpack.c.b16 %v37, %v37
  %v42 = vpack.c.b16 %v38, %v38
  %v43 = vpack.c.b16 %v39, %v39
  %v44 = vpack.c.b16 %v40, %v40
  %vm45 = vcmask 64512
  %v47 = vsel %vm45, %v22, 0
  %vm49 = vcmask 1043456
  %v51 = vsel %vm49, %v41, 0
  %v54 = vsel %vm49, %v42, 0
  %v57 = vsel %vm49, %v43, 0
  %v60 = vsel %vm49, %v44, 0
  %62 = vmatpush.bf16.msra.mxu0 0
  %63 = vmatpush.bf16.msra.mxu0 0
  %64 = vmatpush.bf16.msra.mxu0 0
  %65 = vmatpush.bf16.msra.mxu0 0
  %66 = vmatpush.bf16.msra.mxu0 0
  %67 = vmatpush.bf16.msra.mxu0 0
  %68 = vmatpush.bf16.msra.mxu0 0
  %69 = vmatpush.bf16.msra.mxu0 %v51
  %70 = vmatmul.bf16.gmra.mxu0 %v47
  %v71 = vpop.f32.mrf.mxu0
  %v72 = vadd.f32 %v27, %v71
  %v73 = vpop.f32.mrf.mxu0
  %74 = vdwg.mxu0
  %75 = vmatpush.bf16.msra.mxu0 0
  %76 = vmatpush.bf16.msra.mxu0 0
  %77 = vmatpush.bf16.msra.mxu0 0
  %78 = vmatpush.bf16.msra.mxu0 0
  %79 = vmatpush.bf16.msra.mxu0 0
  %80 = vmatpush.bf16.msra.mxu0 0
  %81 = vmatpush.bf16.msra.mxu0 0
  %82 = vmatpush.bf16.msra.mxu0 %v54
  %83 = vmatmul.bf16.gmra.mxu0 %v47
  %v84 = vpop.f32.mrf.mxu0
  %v85 = vadd.f32 %v28, %v84
  %v86 = vpop.f32.mrf.mxu0
  %87 = vdwg.mxu0
  %88 = vmatpush.bf16.msra.mxu0 0
  %89 = vmatpush.bf16.msra.mxu0 0
  %90 = vmatpush.bf16.msra.mxu0 0
  %91 = vmatpush.bf16.msra.mxu0 0
  %92 = vmatpush.bf16.msra.mxu0 0
  %93 = vmatpush.bf16.msra.mxu0 0
  %94 = vmatpush.bf16.msra.mxu0 0
  %95 = vmatpush.bf16.msra.mxu0 %v57
  %96 = vmatmul.bf16.gmra.mxu0 %v47
  %v97 = vpop.f32.mrf.mxu0
  %v98 = vadd.f32 %v29, %v97
  %v99 = vpop.f32.mrf.mxu0
  %100 = vdwg.mxu0
  %101 = vmatpush.bf16.msra.mxu0 0
  %102 = vmatpush.bf16.msra.mxu0 0
  %103 = vmatpush.bf16.msra.mxu0 0
  %104 = vmatpush.bf16.msra.mxu0 0
  %105 = vmatpush.bf16.msra.mxu0 0
  %106 = vmatpush.bf16.msra.mxu0 0
  %107 = vmatpush.bf16.msra.mxu0 0
  %108 = vmatpush.bf16.msra.mxu0 %v60
  %109 = vmatmul.bf16.gmra.mxu0 %v47
  %v110 = vpop.f32.mrf.mxu0
  %v111 = vadd.f32 %v30, %v110
  %v112 = vpop.f32.mrf.mxu0
  %113 = vdwg.mxu0
  %v114 = vmax.f32 %v72, 0.0
  %v115 = vmax.f32 %v85, 0.0
  %v116 = vmax.f32 %v98, 0.0
  %v117 = vmax.f32 %v111, 0.0
  %v118 = vpack.c.bf16 %v114, %v114
  %v119 = vpack.c.bf16 %v115, %v115
  %v120 = vpack.c.bf16 %v116, %v116
  %v121 = vpack.c.bf16 %v117, %v117
  %v122 = vld [vmem:[%s3] sm:$0xf]
  %v123 = vld [vmem:[%s3 + $0x4] sm:$0xf]
  %v124 = vld [vmem:[%s3 + $0x8] sm:$0xf]
  %v125 = vld [vmem:[%s3 + $0xc] sm:$0xf]
  %v126 = vld [vmem:[%s3 + $0x10] sm:$0xf]
  %v127 = vld [vmem:[%s3 + $0x14] sm:$0xf]
  %v128 = vld [vmem:[%s3 + $0x18] sm:$0xf]
  %v129 = vld [vmem:[%s3 + $0x1c] sm:$0xf]
  %v130 = vld [vmem:[%s3 + $0x20] sm:$0xf]
  %v131 = vld [vmem:[%s3 + $0x24] sm:$0xf]
  %v132 = vld [vmem:[%s3 + $0x28] sm:$0xf]
  %v133 = vld [vmem:[%s3 + $0x2c] sm:$0xf]
  %v134 = vld [vmem:[%s3 + $0x30] sm:$0xf]
  %v135 = vld [vmem:[%s3 + $0x34] sm:$0xf]
  %v136 = vld [vmem:[%s3 + $0x38] sm:$0xf]
  %v137 = vld [vmem:[%s3 + $0x3c] sm:$0xf]
  %v138 = vld [vmem:[%s3 + $0x40] sm:$0xf]
  %v139 = vld [vmem:[%s3 + $0x44] sm:$0xf]
  %v140 = vld [vmem:[%s3 + $0x48] sm:$0xf]
  %v141 = vld [vmem:[%s3 + $0x4c] sm:$0xf]
  %v142 = vld [vmem:[%s3 + $0x50] sm:$0xf]
  %v143 = vld [vmem:[%s3 + $0x54] sm:$0xf]
  %v144 = vld [vmem:[%s3 + $0x58] sm:$0xf]
  %v145 = vld [vmem:[%s3 + $0x5c] sm:$0xf]
  %v146 = vld [vmem:[%s3 + $0x60] sm:$0xf]
  %v147 = vld [vmem:[%s3 + $0x64] sm:$0xf]
  %v148 = vld [vmem:[%s3 + $0x68] sm:$0xf]
  %v149 = vld [vmem:[%s3 + $0x6c] sm:$0xf]
  %v150 = vld [vmem:[%s3 + $0x70] sm:$0xf]
  %v151 = vld [vmem:[%s3 + $0x74] sm:$0xf]
  %v152 = vld [vmem:[%s3 + $0x78] sm:$0xf]
  %v153 = vld [vmem:[%s3 + $0x7c] sm:$0xf]
  %v154 = vld [vmem:[%s3 + $0x80] sm:$0xf]
  %v155 = vld [vmem:[%s3 + $0x84] sm:$0xf]
  %v156 = vld [vmem:[%s3 + $0x88] sm:$0xf]
  %v157 = vld [vmem:[%s3 + $0x8c] sm:$0xf]
  %v158 = vld [vmem:[%s3 + $0x90] sm:$0xf]
  %v159 = vld [vmem:[%s3 + $0x94] sm:$0xf]
  %v160 = vld [vmem:[%s3 + $0x98] sm:$0xf]
  %v161 = vld [vmem:[%s3 + $0x9c] sm:$0xf]
  %v162 = vld [vmem:[%s3 + $0xa0] sm:$0xf]
  %v163 = vld [vmem:[%s3 + $0xa4] sm:$0xf]
  %v164 = vld [vmem:[%s3 + $0xa8] sm:$0xf]
  %v165 = vld [vmem:[%s3 + $0xac] sm:$0xf]
  %v166 = vld [vmem:[%s3 + $0xb0] sm:$0xf]
  %v167 = vld [vmem:[%s3 + $0xb4] sm:$0xf]
  %v168 = vld [vmem:[%s3 + $0xb8] sm:$0xf]
  %v169 = vld [vmem:[%s3 + $0xbc] sm:$0xf]
  %v170 = vld [vmem:[%s3 + $0xc0] sm:$0xf]
  %v171 = vld [vmem:[%s3 + $0xc4] sm:$0xf]
  %v172 = vld [vmem:[%s3 + $0xc8] sm:$0xf]
  %v173 = vld [vmem:[%s3 + $0xcc] sm:$0xf]
  %v174 = vld [vmem:[%s3 + $0xd0] sm:$0xf]
  %v175 = vld [vmem:[%s3 + $0xd4] sm:$0xf]
  %v176 = vld [vmem:[%s3 + $0xd8] sm:$0xf]
  %v177 = vld [vmem:[%s3 + $0xdc] sm:$0xf]
  %v178 = vld [vmem:[%s3 + $0xe0] sm:$0xf]
  %v179 = vld [vmem:[%s3 + $0xe4] sm:$0xf]
  %v180 = vld [vmem:[%s3 + $0xe8] sm:$0xf]
  %v181 = vld [vmem:[%s3 + $0xec] sm:$0xf]
  %v182 = vld [vmem:[%s3 + $0xf0] sm:$0xf]
  %v183 = vld [vmem:[%s3 + $0xf4] sm:$0xf]
  %v184 = vld [vmem:[%s3 + $0xf8] sm:$0xf]
  %v185 = vld [vmem:[%s3 + $0xfc] sm:$0xf]
  %v186 = vld [vmem:[%s4] sm:$0x1]
  %v188 = vperm.slane %v186, 0
  %v254 = vunpack.c.l.b16 %v122
  %v255 = vunpack.c.l.b16 %v123
  %v256 = vunpack.c.l.b16 %v124
  %v257 = vunpack.c.l.b16 %v125
  %v258 = vunpack.c.l.b16 %v126
  %v259 = vunpack.c.l.b16 %v127
  %v260 = vunpack.c.l.b16 %v128
  %v261 = vunpack.c.l.b16 %v129
  %v262 = vunpack.c.l.b16 %v130
  %v263 = vunpack.c.l.b16 %v131
  %v264 = vunpack.c.l.b16 %v132
  %v265 = vunpack.c.l.b16 %v133
  %v266 = vunpack.c.l.b16 %v134
  %v267 = vunpack.c.l.b16 %v135
  %v268 = vunpack.c.l.b16 %v136
  %v269 = vunpack.c.l.b16 %v137
  %v270 = vunpack.c.l.b16 %v138
  %v271 = vunpack.c.l.b16 %v139
  %v272 = vunpack.c.l.b16 %v140
  %v273 = vunpack.c.l.b16 %v141
  %v274 = vunpack.c.l.b16 %v142
  %v275 = vunpack.c.l.b16 %v143
  %v276 = vunpack.c.l.b16 %v144
  %v277 = vunpack.c.l.b16 %v145
  %v278 = vunpack.c.l.b16 %v146
  %v279 = vunpack.c.l.b16 %v147
  %v280 = vunpack.c.l.b16 %v148
  %v281 = vunpack.c.l.b16 %v149
  %v282 = vunpack.c.l.b16 %v150
  %v283 = vunpack.c.l.b16 %v151
  %v284 = vunpack.c.l.b16 %v152
  %v285 = vunpack.c.l.b16 %v153
  %v286 = vunpack.c.l.b16 %v154
  %v287 = vunpack.c.l.b16 %v155
  %v288 = vunpack.c.l.b16 %v156
  %v289 = vunpack.c.l.b16 %v157
  %v290 = vunpack.c.l.b16 %v158
  %v291 = vunpack.c.l.b16 %v159
  %v292 = vunpack.c.l.b16 %v160
  %v293 = vunpack.c.l.b16 %v161
  %v294 = vunpack.c.l.b16 %v162
  %v295 = vunpack.c.l.b16 %v163
  %v296 = vunpack.c.l.b16 %v164
  %v297 = vunpack.c.l.b16 %v165
  %v298 = vunpack.c.l.b16 %v166
  %v299 = vunpack.c.l.b16 %v167
  %v300 = vunpack.c.l.b16 %v168
  %v301 = vunpack.c.l.b16 %v169
  %v302 = vunpack.c.l.b16 %v170
  %v303 = vunpack.c.l.b16 %v171
  %v304 = vunpack.c.l.b16 %v172
  %v305 = vunpack.c.l.b16 %v173
  %v306 = vunpack.c.l.b16 %v174
  %v307 = vunpack.c.l.b16 %v175
  %v308 = vunpack.c.l.b16 %v176
  %v309 = vunpack.c.l.b16 %v177
  %v310 = vunpack.c.l.b16 %v178
  %v311 = vunpack.c.l.b16 %v179
  %v312 = vunpack.c.l.b16 %v180
  %v313 = vunpack.c.l.b16 %v181
  %v314 = vunpack.c.l.b16 %v182
  %v315 = vunpack.c.l.b16 %v183
  %v316 = vunpack.c.l.b16 %v184
  %v317 = vunpack.c.l.b16 %v185
  %v318 = vpack.c.b16 %v255, %v254
  %v319 = vpack.c.b16 %v257, %v256
  %v320 = vpack.c.b16 %v259, %v258
  %v321 = vpack.c.b16 %v261, %v260
  %v322 = vpack.c.b16 %v263, %v262
  %v323 = vpack.c.b16 %v265, %v264
  %v324 = vpack.c.b16 %v267, %v266
  %v325 = vpack.c.b16 %v269, %v268
  %v326 = vpack.c.b16 %v271, %v270
  %v327 = vpack.c.b16 %v273, %v272
  %v328 = vpack.c.b16 %v275, %v274
  %v329 = vpack.c.b16 %v277, %v276
  %v330 = vpack.c.b16 %v279, %v278
  %v331 = vpack.c.b16 %v281, %v280
  %v332 = vpack.c.b16 %v283, %v282
  %v333 = vpack.c.b16 %v285, %v284
  %v334 = vpack.c.b16 %v287, %v286
  %v335 = vpack.c.b16 %v289, %v288
  %v336 = vpack.c.b16 %v291, %v290
  %v337 = vpack.c.b16 %v293, %v292
  %v338 = vpack.c.b16 %v295, %v294
  %v339 = vpack.c.b16 %v297, %v296
  %v340 = vpack.c.b16 %v299, %v298
  %v341 = vpack.c.b16 %v301, %v300
  %v342 = vpack.c.b16 %v303, %v302
  %v343 = vpack.c.b16 %v305, %v304
  %v344 = vpack.c.b16 %v307, %v306
  %v345 = vpack.c.b16 %v309, %v308
  %v346 = vpack.c.b16 %v311, %v310
  %v347 = vpack.c.b16 %v313, %v312
  %v348 = vpack.c.b16 %v315, %v314
  %v349 = vpack.c.b16 %v317, %v316
  %382 = vmatpush.bf16.msra.mxu0 %v325
  %383 = vmatpush.bf16.msra.mxu0 %v324
  %384 = vmatpush.bf16.msra.mxu0 %v323
  %385 = vmatpush.bf16.msra.mxu0 %v322
  %386 = vmatpush.bf16.msra.mxu0 %v321
  %387 = vmatpush.bf16.msra.mxu0 %v320
  %388 = vmatpush.bf16.msra.mxu0 %v319
  %389 = vmatpush.bf16.msra.mxu0 %v318
  %390 = vmatmul.bf16.gmra.mxu0 %v118
  %v391 = vpop.f32.mrf.mxu0
  %v392 = vadd.f32 %v188, %v391
  %v393 = vpop.f32.mrf.mxu0
  %394 = vdwg.mxu0
  %395 = vmatpush.bf16.msra.mxu0 %v333
  %396 = vmatpush.bf16.msra.mxu0 %v332
  %397 = vmatpush.bf16.msra.mxu0 %v331
  %398 = vmatpush.bf16.msra.mxu0 %v330
  %399 = vmatpush.bf16.msra.mxu0 %v329
  %400 = vmatpush.bf16.msra.mxu0 %v328
  %401 = vmatpush.bf16.msra.mxu0 %v327
  %402 = vmatpush.bf16.msra.mxu0 %v326
  %403 = vmatmul.bf16.gmra.mxu0 %v119
  %v404 = vpop.f32.mrf.mxu0
  %v405 = vadd.f32 %v392, %v404
  %v406 = vpop.f32.mrf.mxu0
  %407 = vdwg.mxu0
  %408 = vmatpush.bf16.msra.mxu0 %v341
  %409 = vmatpush.bf16.msra.mxu0 %v340
  %410 = vmatpush.bf16.msra.mxu0 %v339
  %411 = vmatpush.bf16.msra.mxu0 %v338
  %412 = vmatpush.bf16.msra.mxu0 %v337
  %413 = vmatpush.bf16.msra.mxu0 %v336
  %414 = vmatpush.bf16.msra.mxu0 %v335
  %415 = vmatpush.bf16.msra.mxu0 %v334
  %416 = vmatmul.bf16.gmra.mxu0 %v120
  %v417 = vpop.f32.mrf.mxu0
  %v418 = vadd.f32 %v405, %v417
  %v419 = vpop.f32.mrf.mxu0
  %420 = vdwg.mxu0
  %421 = vmatpush.bf16.msra.mxu0 %v349
  %422 = vmatpush.bf16.msra.mxu0 %v348
  %423 = vmatpush.bf16.msra.mxu0 %v347
  %424 = vmatpush.bf16.msra.mxu0 %v346
  %425 = vmatpush.bf16.msra.mxu0 %v345
  %426 = vmatpush.bf16.msra.mxu0 %v344
  %427 = vmatpush.bf16.msra.mxu0 %v343
  %428 = vmatpush.bf16.msra.mxu0 %v342
  %429 = vmatmul.bf16.gmra.mxu0 %v121
  %v430 = vpop.f32.mrf.mxu0
  %v431 = vadd.f32 %v418, %v430
  %v432 = vpop.f32.mrf.mxu0
  %433 = vdwg.mxu0
  %434 = vst [vmem:[%s5] sm:$0x3] %v431
  // Predicated region
  $region22: #{unsupervised_detector_forward.3} parent=0 // pred_check
    _
  $region23: #{unsupervised_detector_forward.3} parent=0 // pred_check_branch
    %436 = sbr.rel (0) target = $region25
  $region24: #{unsupervised_detector_forward.3} parent=0 // pred_region
    _
  $region25: #{unsupervised_detector_forward.3} parent=0 // pred_fallthru
    _
  // Predicated region
  $region26: #{unsupervised_detector_forward.3} parent=0 // pred_check
    _
  $region27: #{unsupervised_detector_forward.3} parent=0 // pred_check_branch
    %438 = sbr.rel (0) target = $region29
  $region28: #{unsupervised_detector_forward.3} parent=0 // pred_region
    _
  $region29: #{unsupervised_detector_forward.3} parent=0 // pred_fallthru
    _

// kernel: unsupervised_detector_forward.4
$region0: #{unsupervised_detector_forward.4}
  #allocation0 [shape = 'u32[]', space=smem, size = 0x4, offset = 0x4, fixed_abs, tag = 'smem constant byte address 0x4 - core index']
  #allocation1 [shape = 'u32[72,128]{1,0:T(1,128)}', space=vmem, size = 0x9000, scoped, tag = 'internal scratch']
  %s0 = inlined_call_operand.vmem [shape: f32[66,8], index: 0, kind: input, shape index: {}]
  %s1 = inlined_call_operand.vmem [shape: bf16[8,512], index: 1, kind: input, shape index: {}]
  %s2 = inlined_call_operand.vmem [shape: f32[1,512], index: 2, kind: input, shape index: {}]
  %s3 = inlined_call_operand.vmem [shape: bf16[512,128], index: 3, kind: input, shape index: {}]
  %s4 = inlined_call_operand.vmem [shape: f32[1,128], index: 4, kind: input, shape index: {}]
  %s5 = inlined_call_operand.vmem [shape: f32[66,128], index: 5, kind: output, shape index: {}]
  %s6 = sld [smem:[#allocation0]]
  $region30: #{unsupervised_detector_forward.4} parent=0
    _
  %s8 = ssub.s32 1, %s6
  %s9 = scalar_select 0, %s8, %s6
  // Predicated region
  $region2: #{unsupervised_detector_forward.4} parent=0 // pred_check
    _
  $region3: #{unsupervised_detector_forward.4} parent=0 // pred_check_branch
    %11 = sbr.rel (0) target = $region5
  $region4: #{unsupervised_detector_forward.4} parent=0 // pred_region
    _
  $region5: #{unsupervised_detector_forward.4} parent=0 // pred_fallthru
    _
  // Predicated region
  $region6: #{unsupervised_detector_forward.4} parent=0 // pred_check
    _
  $region7: #{unsupervised_detector_forward.4} parent=0 // pred_check_branch
    %13 = sbr.rel (0) target = $region9
  $region8: #{unsupervised_detector_forward.4} parent=0 // pred_region
    _
  $region9: #{unsupervised_detector_forward.4} parent=0 // pred_fallthru
    _
  // Predicated region
  $region10: #{unsupervised_detector_forward.4} parent=0 // pred_check
    _
  $region11: #{unsupervised_detector_forward.4} parent=0 // pred_check_branch
    %15 = sbr.rel (0) target = $region13
  $region12: #{unsupervised_detector_forward.4} parent=0 // pred_region
    _
  $region13: #{unsupervised_detector_forward.4} parent=0 // pred_fallthru
    _
  // Predicated region
  $region14: #{unsupervised_detector_forward.4} parent=0 // pred_check
    _
  $region15: #{unsupervised_detector_forward.4} parent=0 // pred_check_branch
    %17 = sbr.rel (0) target = $region17
  $region16: #{unsupervised_detector_forward.4} parent=0 // pred_region
    _
  $region17: #{unsupervised_detector_forward.4} parent=0 // pred_fallthru
    _
  // Predicated region
  $region18: #{unsupervised_detector_forward.4} parent=0 // pred_check
    _
  $region19: #{unsupervised_detector_forward.4} parent=0 // pred_check_branch
    %19 = sbr.rel (0) target = $region21
  $region20: #{unsupervised_detector_forward.4} parent=0 // pred_region
    _
  $region21: #{unsupervised_detector_forward.4} parent=0 // pred_fallthru
    _
  %v21 = vld [vmem:[%s0] sm:$0xff]
  %v22 = vld [vmem:[%s0 + $0x8] sm:$0xff]
  %v23 = vld [vmem:[%s0 + $0x10] sm:$0xff]
  %v24 = vld [vmem:[%s0 + $0x18] sm:$0xff]
  %v25 = vld [vmem:[%s0 + $0x20] sm:$0xff]
  %v26 = vld [vmem:[%s0 + $0x28] sm:$0xff]
  %v27 = vld [vmem:[%s0 + $0x30] sm:$0xff]
  %v28 = vld [vmem:[%s0 + $0x38] sm:$0xff]
  %v29 = vld [vmem:[%s0 + $0x40] sm:$0x3]
  %v30 = vpack.c.bf16 %v22, %v21
  %v31 = vpack.c.bf16 %v24, %v23
  %v32 = vpack.c.bf16 %v26, %v25
  %v33 = vpack.c.bf16 %v28, %v27
  %v34 = vpack.c.bf16 %v29, %v29
  %v35 = vld [vmem:[%s1] sm:$0xff]
  %v36 = vld [vmem:[%s1 + $0x8] sm:$0xff]
  %v37 = vld [vmem:[%s2] sm:$0xf]
  %v39 = vperm.slane %v37, 0
  %v40 = vperm.slane %v37, 1
  %v41 = vperm.slane %v37, 2
  %v42 = vperm.slane %v37, 3
  %v49 = vunpack.c.l.b16 %v35
  %v50 = vunpack.c.h.b16 %v35
  %v51 = vunpack.c.l.b16 %v36
  %v52 = vunpack.c.h.b16 %v36
  %v53 = vpack.c.b16 %v49, %v49
  %v54 = vpack.c.b16 %v50, %v50
  %v55 = vpack.c.b16 %v51, %v51
  %v56 = vpack.c.b16 %v52, %v52
  %vm57 = vcmask 64512
  %v59 = vsel %vm57, %v30, 0
  %v62 = vsel %vm57, %v31, 0
  %v65 = vsel %vm57, %v32, 0
  %v68 = vsel %vm57, %v33, 0
  %v71 = vsel %vm57, %v34, 0
  %vm73 = vcmask 1043456
  %v75 = vsel %vm73, %v53, 0
  %v78 = vsel %vm73, %v54, 0
  %v81 = vsel %vm73, %v55, 0
  %v84 = vsel %vm73, %v56, 0
  %86 = vmatpush.bf16.msra.mxu0 0
  %87 = vmatpush.bf16.msra.mxu0 0
  %88 = vmatpush.bf16.msra.mxu0 0
  %89 = vmatpush.bf16.msra.mxu0 0
  %90 = vmatpush.bf16.msra.mxu0 0
  %91 = vmatpush.bf16.msra.mxu0 0
  %92 = vmatpush.bf16.msra.mxu0 0
  %93 = vmatpush.bf16.msra.mxu0 %v75
  %94 = vmatmul.bf16.gmra.mxu0 %v59
  %v95 = vpop.f32.mrf.mxu0
  %v96 = vadd.f32 %v39, %v95
  %v97 = vpop.f32.mrf.mxu0
  %v98 = vadd.f32 %v39, %v97
  %99 = vmatmul.bf16.gmra.mxu0 %v62
  %v100 = vpop.f32.mrf.mxu0
  %v101 = vadd.f32 %v39, %v100
  %v102 = vpop.f32.mrf.mxu0
  %v103 = vadd.f32 %v39, %v102
  %104 = vmatmul.bf16.gmra.mxu0 %v65
  %v105 = vpop.f32.mrf.mxu0
  %v106 = vadd.f32 %v39, %v105
  %v107 = vpop.f32.mrf.mxu0
  %v108 = vadd.f32 %v39, %v107
  %109 = vmatmul.bf16.gmra.mxu0 %v68
  %v110 = vpop.f32.mrf.mxu0
  %v111 = vadd.f32 %v39, %v110
  %v112 = vpop.f32.mrf.mxu0
  %v113 = vadd.f32 %v39, %v112
  %114 = vmatmul.bf16.gmra.mxu0 %v71
  %v115 = vpop.f32.mrf.mxu0
  %v116 = vadd.f32 %v39, %v115
  %v117 = vpop.f32.mrf.mxu0
  %118 = vdwg.mxu0
  %119 = vmatpush.bf16.msra.mxu0 0
  %120 = vmatpush.bf16.msra.mxu0 0
  %121 = vmatpush.bf16.msra.mxu0 0
  %122 = vmatpush.bf16.msra.mxu0 0
  %123 = vmatpush.bf16.msra.mxu0 0
  %124 = vmatpush.bf16.msra.mxu0 0
  %125 = vmatpush.bf16.msra.mxu0 0
  %126 = vmatpush.bf16.msra.mxu0 %v78
  %127 = vmatmul.bf16.gmra.mxu0 %v59
  %v128 = vpop.f32.mrf.mxu0
  %v129 = vadd.f32 %v40, %v128
  %v130 = vpop.f32.mrf.mxu0
  %v131 = vadd.f32 %v40, %v130
  %132 = vmatmul.bf16.gmra.mxu0 %v62
  %v133 = vpop.f32.mrf.mxu0
  %v134 = vadd.f32 %v40, %v133
  %v135 = vpop.f32.mrf.mxu0
  %v136 = vadd.f32 %v40, %v135
  %137 = vmatmul.bf16.gmra.mxu0 %v65
  %v138 = vpop.f32.mrf.mxu0
  %v139 = vadd.f32 %v40, %v138
  %v140 = vpop.f32.mrf.mxu0
  %v141 = vadd.f32 %v40, %v140
  %142 = vmatmul.bf16.gmra.mxu0 %v68
  %v143 = vpop.f32.mrf.mxu0
  %v144 = vadd.f32 %v40, %v143
  %v145 = vpop.f32.mrf.mxu0
  %v146 = vadd.f32 %v40, %v145
  %147 = vmatmul.bf16.gmra.mxu0 %v71
  %v148 = vpop.f32.mrf.mxu0
  %v149 = vadd.f32 %v40, %v148
  %v150 = vpop.f32.mrf.mxu0
  %151 = vdwg.mxu0
  %152 = vmatpush.bf16.msra.mxu0 0
  %153 = vmatpush.bf16.msra.mxu0 0
  %154 = vmatpush.bf16.msra.mxu0 0
  %155 = vmatpush.bf16.msra.mxu0 0
  %156 = vmatpush.bf16.msra.mxu0 0
  %157 = vmatpush.bf16.msra.mxu0 0
  %158 = vmatpush.bf16.msra.mxu0 0
  %159 = vmatpush.bf16.msra.mxu0 %v81
  %160 = vmatmul.bf16.gmra.mxu0 %v59
  %v161 = vpop.f32.mrf.mxu0
  %v162 = vadd.f32 %v41, %v161
  %v163 = vpop.f32.mrf.mxu0
  %v164 = vadd.f32 %v41, %v163
  %165 = vmatmul.bf16.gmra.mxu0 %v62
  %v166 = vpop.f32.mrf.mxu0
  %v167 = vadd.f32 %v41, %v166
  %v168 = vpop.f32.mrf.mxu0
  %v169 = vadd.f32 %v41, %v168
  %170 = vmatmul.bf16.gmra.mxu0 %v65
  %v171 = vpop.f32.mrf.mxu0
  %v172 = vadd.f32 %v41, %v171
  %v173 = vpop.f32.mrf.mxu0
  %v174 = vadd.f32 %v41, %v173
  %175 = vmatmul.bf16.gmra.mxu0 %v68
  %v176 = vpop.f32.mrf.mxu0
  %v177 = vadd.f32 %v41, %v176
  %v178 = vpop.f32.mrf.mxu0
  %v179 = vadd.f32 %v41, %v178
  %180 = vmatmul.bf16.gmra.mxu0 %v71
  %v181 = vpop.f32.mrf.mxu0
  %v182 = vadd.f32 %v41, %v181
  %v183 = vpop.f32.mrf.mxu0
  %184 = vdwg.mxu0
  %185 = vmatpush.bf16.msra.mxu0 0
  %186 = vmatpush.bf16.msra.mxu0 0
  %187 = vmatpush.bf16.msra.mxu0 0
  %188 = vmatpush.bf16.msra.mxu0 0
  %189 = vmatpush.bf16.msra.mxu0 0
  %190 = vmatpush.bf16.msra.mxu0 0
  %191 = vmatpush.bf16.msra.mxu0 0
  %192 = vmatpush.bf16.msra.mxu0 %v84
  %193 = vmatmul.bf16.gmra.mxu0 %v59
  %v194 = vpop.f32.mrf.mxu0
  %v195 = vadd.f32 %v42, %v194
  %v196 = vpop.f32.mrf.mxu0
  %v197 = vadd.f32 %v42, %v196
  %198 = vmatmul.bf16.gmra.mxu0 %v62
  %v199 = vpop.f32.mrf.mxu0
  %v200 = vadd.f32 %v42, %v199
  %v201 = vpop.f32.mrf.mxu0
  %v202 = vadd.f32 %v42, %v201
  %203 = vmatmul.bf16.gmra.mxu0 %v65
  %v204 = vpop.f32.mrf.mxu0
  %v205 = vadd.f32 %v42, %v204
  %v206 = vpop.f32.mrf.mxu0
  %v207 = vadd.f32 %v42, %v206
  %208 = vmatmul.bf16.gmra.mxu0 %v68
  %v209 = vpop.f32.mrf.mxu0
  %v210 = vadd.f32 %v42, %v209
  %v211 = vpop.f32.mrf.mxu0
  %v212 = vadd.f32 %v42, %v211
  %213 = vmatmul.bf16.gmra.mxu0 %v71
  %v214 = vpop.f32.mrf.mxu0
  %v215 = vadd.f32 %v42, %v214
  %v216 = vpop.f32.mrf.mxu0
  %217 = vdwg.mxu0
  %v218 = vmax.f32 %v96, 0.0
  %v219 = vmax.f32 %v129, 0.0
  %v220 = vmax.f32 %v162, 0.0
  %v221 = vmax.f32 %v195, 0.0
  %v222 = vmax.f32 %v98, 0.0
  %v223 = vmax.f32 %v131, 0.0
  %v224 = vmax.f32 %v164, 0.0
  %v225 = vmax.f32 %v197, 0.0
  %v226 = vmax.f32 %v101, 0.0
  %v227 = vmax.f32 %v134, 0.0
  %v228 = vmax.f32 %v167, 0.0
  %v229 = vmax.f32 %v200, 0.0
  %v230 = vmax.f32 %v103, 0.0
  %v231 = vmax.f32 %v136, 0.0
  %v232 = vmax.f32 %v169, 0.0
  %v233 = vmax.f32 %v202, 0.0
  %v234 = vmax.f32 %v106, 0.0
  %v235 = vmax.f32 %v139, 0.0
  %v236 = vmax.f32 %v172, 0.0
  %v237 = vmax.f32 %v205, 0.0
  %v238 = vmax.f32 %v108, 0.0
  %v239 = vmax.f32 %v141, 0.0
  %v240 = vmax.f32 %v174, 0.0
  %v241 = vmax.f32 %v207, 0.0
  %v242 = vmax.f32 %v111, 0.0
  %v243 = vmax.f32 %v144, 0.0
  %v244 = vmax.f32 %v177, 0.0
  %v245 = vmax.f32 %v210, 0.0
  %v246 = vmax.f32 %v113, 0.0
  %v247 = vmax.f32 %v146, 0.0
  %v248 = vmax.f32 %v179, 0.0
  %v249 = vmax.f32 %v212, 0.0
  %v250 = vmax.f32 %v116, 0.0
  %v251 = vmax.f32 %v149, 0.0
  %v252 = vmax.f32 %v182, 0.0
  %v253 = vmax.f32 %v215, 0.0
  %v254 = vpack.c.bf16 %v222, %v218
  %v255 = vpack.c.bf16 %v223, %v219
  %v256 = vpack.c.bf16 %v224, %v220
  %v257 = vpack.c.bf16 %v225, %v221
  %v258 = vpack.c.bf16 %v230, %v226
  %v259 = vpack.c.bf16 %v231, %v227
  %v260 = vpack.c.bf16 %v232, %v228
  %v261 = vpack.c.bf16 %v233, %v229
  %v262 = vpack.c.bf16 %v238, %v234
  %v263 = vpack.c.bf16 %v239, %v235
  %v264 = vpack.c.bf16 %v240, %v236
  %v265 = vpack.c.bf16 %v241, %v237
  %v266 = vpack.c.bf16 %v246, %v242
  %v267 = vpack.c.bf16 %v247, %v243
  %v268 = vpack.c.bf16 %v248, %v244
  %v269 = vpack.c.bf16 %v249, %v245
  %v270 = vpack.c.bf16 %v250, %v250
  %v271 = vpack.c.bf16 %v251, %v251
  %v272 = vpack.c.bf16 %v252, %v252
  %v273 = vpack.c.bf16 %v253, %v253
  %v274 = vld [vmem:[%s3] sm:$0xf]
  %v275 = vld [vmem:[%s3 + $0x4] sm:$0xf]
  %v276 = vld [vmem:[%s3 + $0x8] sm:$0xf]
  %v277 = vld [vmem:[%s3 + $0xc] sm:$0xf]
  %v278 = vld [vmem:[%s3 + $0x10] sm:$0xf]
  %v279 = vld [vmem:[%s3 + $0x14] sm:$0xf]
  %v280 = vld [vmem:[%s3 + $0x18] sm:$0xf]
  %v281 = vld [vmem:[%s3 + $0x1c] sm:$0xf]
  %v282 = vld [vmem:[%s3 + $0x20] sm:$0xf]
  %v283 = vld [vmem:[%s3 + $0x24] sm:$0xf]
  %v284 = vld [vmem:[%s3 + $0x28] sm:$0xf]
  %v285 = vld [vmem:[%s3 + $0x2c] sm:$0xf]
  %v286 = vld [vmem:[%s3 + $0x30] sm:$0xf]
  %v287 = vld [vmem:[%s3 + $0x34] sm:$0xf]
  %v288 = vld [vmem:[%s3 + $0x38] sm:$0xf]
  %v289 = vld [vmem:[%s3 + $0x3c] sm:$0xf]
  %v290 = vld [vmem:[%s3 + $0x40] sm:$0xf]
  %v291 = vld [vmem:[%s3 + $0x44] sm:$0xf]
  %v292 = vld [vmem:[%s3 + $0x48] sm:$0xf]
  %v293 = vld [vmem:[%s3 + $0x4c] sm:$0xf]
  %v294 = vld [vmem:[%s3 + $0x50] sm:$0xf]
  %v295 = vld [vmem:[%s3 + $0x54] sm:$0xf]
  %v296 = vld [vmem:[%s3 + $0x58] sm:$0xf]
  %v297 = vld [vmem:[%s3 + $0x5c] sm:$0xf]
  %v298 = vld [vmem:[%s3 + $0x60] sm:$0xf]
  %v299 = vld [vmem:[%s3 + $0x64] sm:$0xf]
  %v300 = vld [vmem:[%s3 + $0x68] sm:$0xf]
  %v301 = vld [vmem:[%s3 + $0x6c] sm:$0xf]
  %v302 = vld [vmem:[%s3 + $0x70] sm:$0xf]
  %v303 = vld [vmem:[%s3 + $0x74] sm:$0xf]
  %v304 = vld [vmem:[%s3 + $0x78] sm:$0xf]
  %v305 = vld [vmem:[%s3 + $0x7c] sm:$0xf]
  %v306 = vld [vmem:[%s3 + $0x80] sm:$0xf]
  %v307 = vld [vmem:[%s3 + $0x84] sm:$0xf]
  %v308 = vld [vmem:[%s3 + $0x88] sm:$0xf]
  %v309 = vld [vmem:[%s3 + $0x8c] sm:$0xf]
  %v310 = vld [vmem:[%s3 + $0x90] sm:$0xf]
  %v311 = vld [vmem:[%s3 + $0x94] sm:$0xf]
  %v312 = vld [vmem:[%s3 + $0x98] sm:$0xf]
  %v313 = vld [vmem:[%s3 + $0x9c] sm:$0xf]
  %v314 = vld [vmem:[%s3 + $0xa0] sm:$0xf]
  %v315 = vld [vmem:[%s3 + $0xa4] sm:$0xf]
  %v316 = vld [vmem:[%s3 + $0xa8] sm:$0xf]
  %v317 = vld [vmem:[%s3 + $0xac] sm:$0xf]
  %v318 = vld [vmem:[%s3 + $0xb0] sm:$0xf]
  %v319 = vld [vmem:[%s3 + $0xb4] sm:$0xf]
  %v320 = vld [vmem:[%s3 + $0xb8] sm:$0xf]
  %v321 = vld [vmem:[%s3 + $0xbc] sm:$0xf]
  %v322 = vld [vmem:[%s3 + $0xc0] sm:$0xf]
  %v323 = vld [vmem:[%s3 + $0xc4] sm:$0xf]
  %v324 = vld [vmem:[%s3 + $0xc8] sm:$0xf]
  %v325 = vld [vmem:[%s3 + $0xcc] sm:$0xf]
  %v326 = vld [vmem:[%s3 + $0xd0] sm:$0xf]
  %v327 = vld [vmem:[%s3 + $0xd4] sm:$0xf]
  %v328 = vld [vmem:[%s3 + $0xd8] sm:$0xf]
  %v329 = vld [vmem:[%s3 + $0xdc] sm:$0xf]
  %v330 = vld [vmem:[%s3 + $0xe0] sm:$0xf]
  %v331 = vld [vmem:[%s3 + $0xe4] sm:$0xf]
  %v332 = vld [vmem:[%s3 + $0xe8] sm:$0xf]
  %v333 = vld [vmem:[%s3 + $0xec] sm:$0xf]
  %v334 = vld [vmem:[%s3 + $0xf0] sm:$0xf]
  %v335 = vld [vmem:[%s3 + $0xf4] sm:$0xf]
  %v336 = vld [vmem:[%s3 + $0xf8] sm:$0xf]
  %v337 = vld [vmem:[%s3 + $0xfc] sm:$0xf]
  %v338 = vld [vmem:[%s4] sm:$0x1]
  %v340 = vperm.slane %v338, 0
  %v406 = vunpack.c.l.b16 %v274
  %v407 = vunpack.c.l.b16 %v275
  %v408 = vunpack.c.l.b16 %v276
  %v409 = vunpack.c.l.b16 %v277
  %v410 = vunpack.c.l.b16 %v278
  %v411 = vunpack.c.l.b16 %v279
  %v412 = vunpack.c.l.b16 %v280
  %v413 = vunpack.c.l.b16 %v281
  %v414 = vunpack.c.l.b16 %v282
  %v415 = vunpack.c.l.b16 %v283
  %v416 = vunpack.c.l.b16 %v284
  %v417 = vunpack.c.l.b16 %v285
  %v418 = vunpack.c.l.b16 %v286
  %v419 = vunpack.c.l.b16 %v287
  %v420 = vunpack.c.l.b16 %v288
  %v421 = vunpack.c.l.b16 %v289
  %v422 = vunpack.c.l.b16 %v290
  %v423 = vunpack.c.l.b16 %v291
  %v424 = vunpack.c.l.b16 %v292
  %v425 = vunpack.c.l.b16 %v293
  %v426 = vunpack.c.l.b16 %v294
  %v427 = vunpack.c.l.b16 %v295
  %v428 = vunpack.c.l.b16 %v296
  %v429 = vunpack.c.l.b16 %v297
  %v430 = vunpack.c.l.b16 %v298
  %v431 = vunpack.c.l.b16 %v299
  %v432 = vunpack.c.l.b16 %v300
  %v433 = vunpack.c.l.b16 %v301
  %v434 = vunpack.c.l.b16 %v302
  %v435 = vunpack.c.l.b16 %v303
  %v436 = vunpack.c.l.b16 %v304
  %v437 = vunpack.c.l.b16 %v305
  %v438 = vunpack.c.l.b16 %v306
  %v439 = vunpack.c.l.b16 %v307
  %v440 = vunpack.c.l.b16 %v308
  %v441 = vunpack.c.l.b16 %v309
  %v442 = vunpack.c.l.b16 %v310
  %v443 = vunpack.c.l.b16 %v311
  %v444 = vunpack.c.l.b16 %v312
  %v445 = vunpack.c.l.b16 %v313
  %v446 = vunpack.c.l.b16 %v314
  %v447 = vunpack.c.l.b16 %v315
  %v448 = vunpack.c.l.b16 %v316
  %v449 = vunpack.c.l.b16 %v317
  %v450 = vunpack.c.l.b16 %v318
  %v451 = vunpack.c.l.b16 %v319
  %v452 = vunpack.c.l.b16 %v320
  %v453 = vunpack.c.l.b16 %v321
  %v454 = vunpack.c.l.b16 %v322
  %v455 = vunpack.c.l.b16 %v323
  %v456 = vunpack.c.l.b16 %v324
  %v457 = vunpack.c.l.b16 %v325
  %v458 = vunpack.c.l.b16 %v326
  %v459 = vunpack.c.l.b16 %v327
  %v460 = vunpack.c.l.b16 %v328
  %v461 = vunpack.c.l.b16 %v329
  %v462 = vunpack.c.l.b16 %v330
  %v463 = vunpack.c.l.b16 %v331
  %v464 = vunpack.c.l.b16 %v332
  %v465 = vunpack.c.l.b16 %v333
  %v466 = vunpack.c.l.b16 %v334
  %v467 = vunpack.c.l.b16 %v335
  %v468 = vunpack.c.l.b16 %v336
  %v469 = vunpack.c.l.b16 %v337
  %v470 = vpack.c.b16 %v407, %v406
  %v471 = vpack.c.b16 %v409, %v408
  %v472 = vpack.c.b16 %v411, %v410
  %v473 = vpack.c.b16 %v413, %v412
  %v474 = vpack.c.b16 %v415, %v414
  %v475 = vpack.c.b16 %v417, %v416
  %v476 = vpack.c.b16 %v419, %v418
  %v477 = vpack.c.b16 %v421, %v420
  %v478 = vpack.c.b16 %v423, %v422
  %v479 = vpack.c.b16 %v425, %v424
  %v480 = vpack.c.b16 %v427, %v426
  %v481 = vpack.c.b16 %v429, %v428
  %v482 = vpack.c.b16 %v431, %v430
  %v483 = vpack.c.b16 %v433, %v432
  %v484 = vpack.c.b16 %v435, %v434
  %v485 = vpack.c.b16 %v437, %v436
  %v486 = vpack.c.b16 %v439, %v438
  %v487 = vpack.c.b16 %v441, %v440
  %v488 = vpack.c.b16 %v443, %v442
  %v489 = vpack.c.b16 %v445, %v444
  %v490 = vpack.c.b16 %v447, %v446
  %v491 = vpack.c.b16 %v449, %v448
  %v492 = vpack.c.b16 %v451, %v450
  %v493 = vpack.c.b16 %v453, %v452
  %v494 = vpack.c.b16 %v455, %v454
  %v495 = vpack.c.b16 %v457, %v456
  %v496 = vpack.c.b16 %v459, %v458
  %v497 = vpack.c.b16 %v461, %v460
  %v498 = vpack.c.b16 %v463, %v462
  %v499 = vpack.c.b16 %v465, %v464
  %v500 = vpack.c.b16 %v467, %v466
  %v501 = vpack.c.b16 %v469, %v468
  %534 = vmatpush.bf16.msra.mxu0 %v477
  %535 = vmatpush.bf16.msra.mxu0 %v476
  %536 = vmatpush.bf16.msra.mxu0 %v475
  %537 = vmatpush.bf16.msra.mxu0 %v474
  %538 = vmatpush.bf16.msra.mxu0 %v473
  %539 = vmatpush.bf16.msra.mxu0 %v472
  %540 = vmatpush.bf16.msra.mxu0 %v471
  %541 = vmatpush.bf16.msra.mxu0 %v470
  %542 = vmatmul.bf16.gmra.mxu0 %v254
  %v543 = vpop.f32.mrf.mxu0
  %v544 = vadd.f32 %v340, %v543
  %v545 = vpop.f32.mrf.mxu0
  %v546 = vadd.f32 %v340, %v545
  %547 = vmatmul.bf16.gmra.mxu0 %v258
  %v548 = vpop.f32.mrf.mxu0
  %v549 = vadd.f32 %v340, %v548
  %v550 = vpop.f32.mrf.mxu0
  %v551 = vadd.f32 %v340, %v550
  %552 = vmatmul.bf16.gmra.mxu0 %v262
  %v553 = vpop.f32.mrf.mxu0
  %v554 = vadd.f32 %v340, %v553
  %v555 = vpop.f32.mrf.mxu0
  %v556 = vadd.f32 %v340, %v555
  %557 = vmatmul.bf16.gmra.mxu0 %v266
  %v558 = vpop.f32.mrf.mxu0
  %v559 = vadd.f32 %v340, %v558
  %v560 = vpop.f32.mrf.mxu0
  %v561 = vadd.f32 %v340, %v560
  %562 = vmatmul.bf16.gmra.mxu0 %v270
  %v563 = vpop.f32.mrf.mxu0
  %v564 = vadd.f32 %v340, %v563
  %v565 = vpop.f32.mrf.mxu0
  %566 = vdwg.mxu0
  %567 = vmatpush.bf16.msra.mxu0 %v485
  %568 = vmatpush.bf16.msra.mxu0 %v484
  %569 = vmatpush.bf16.msra.mxu0 %v483
  %570 = vmatpush.bf16.msra.mxu0 %v482
  %571 = vmatpush.bf16.msra.mxu0 %v481
  %572 = vmatpush.bf16.msra.mxu0 %v480
  %573 = vmatpush.bf16.msra.mxu0 %v479
  %574 = vmatpush.bf16.msra.mxu0 %v478
  %575 = vmatmul.bf16.gmra.mxu0 %v255
  %v576 = vpop.f32.mrf.mxu0
  %v577 = vadd.f32 %v544, %v576
  %v578 = vpop.f32.mrf.mxu0
  %v579 = vadd.f32 %v546, %v578
  %580 = vmatmul.bf16.gmra.mxu0 %v259
  %v581 = vpop.f32.mrf.mxu0
  %v582 = vadd.f32 %v549, %v581
  %v583 = vpop.f32.mrf.mxu0
  %v584 = vadd.f32 %v551, %v583
  %585 = vmatmul.bf16.gmra.mxu0 %v263
  %v586 = vpop.f32.mrf.mxu0
  %v587 = vadd.f32 %v554, %v586
  %v588 = vpop.f32.mrf.mxu0
  %v589 = vadd.f32 %v556, %v588
  %590 = vmatmul.bf16.gmra.mxu0 %v267
  %v591 = vpop.f32.mrf.mxu0
  %v592 = vadd.f32 %v559, %v591
  %v593 = vpop.f32.mrf.mxu0
  %v594 = vadd.f32 %v561, %v593
  %595 = vmatmul.bf16.gmra.mxu0 %v271
  %v596 = vpop.f32.mrf.mxu0
  %v597 = vadd.f32 %v564, %v596
  %v598 = vpop.f32.mrf.mxu0
  %599 = vdwg.mxu0
  %600 = vmatpush.bf16.msra.mxu0 %v493
  %601 = vmatpush.bf16.msra.mxu0 %v492
  %602 = vmatpush.bf16.msra.mxu0 %v491
  %603 = vmatpush.bf16.msra.mxu0 %v490
  %604 = vmatpush.bf16.msra.mxu0 %v489
  %605 = vmatpush.bf16.msra.mxu0 %v488
  %606 = vmatpush.bf16.msra.mxu0 %v487
  %607 = vmatpush.bf16.msra.mxu0 %v486
  %608 = vmatmul.bf16.gmra.mxu0 %v256
  %v609 = vpop.f32.mrf.mxu0
  %v610 = vadd.f32 %v577, %v609
  %v611 = vpop.f32.mrf.mxu0
  %v612 = vadd.f32 %v579, %v611
  %613 = vmatmul.bf16.gmra.mxu0 %v260
  %v614 = vpop.f32.mrf.mxu0
  %v615 = vadd.f32 %v582, %v614
  %v616 = vpop.f32.mrf.mxu0
  %v617 = vadd.f32 %v584, %v616
  %618 = vmatmul.bf16.gmra.mxu0 %v264
  %v619 = vpop.f32.mrf.mxu0
  %v620 = vadd.f32 %v587, %v619
  %v621 = vpop.f32.mrf.mxu0
  %v622 = vadd.f32 %v589, %v621
  %623 = vmatmul.bf16.gmra.mxu0 %v268
  %v624 = vpop.f32.mrf.mxu0
  %v625 = vadd.f32 %v592, %v624
  %v626 = vpop.f32.mrf.mxu0
  %v627 = vadd.f32 %v594, %v626
  %628 = vmatmul.bf16.gmra.mxu0 %v272
  %v629 = vpop.f32.mrf.mxu0
  %v630 = vadd.f32 %v597, %v629
  %v631 = vpop.f32.mrf.mxu0
  %632 = vdwg.mxu0
  %633 = vmatpush.bf16.msra.mxu0 %v501
  %634 = vmatpush.bf16.msra.mxu0 %v500
  %635 = vmatpush.bf16.msra.mxu0 %v499
  %636 = vmatpush.bf16.msra.mxu0 %v498
  %637 = vmatpush.bf16.msra.mxu0 %v497
  %638 = vmatpush.bf16.msra.mxu0 %v496
  %639 = vmatpush.bf16.msra.mxu0 %v495
  %640 = vmatpush.bf16.msra.mxu0 %v494
  %641 = vmatmul.bf16.gmra.mxu0 %v257
  %v642 = vpop.f32.mrf.mxu0
  %v643 = vadd.f32 %v610, %v642
  %v644 = vpop.f32.mrf.mxu0
  %v645 = vadd.f32 %v612, %v644
  %646 = vmatmul.bf16.gmra.mxu0 %v261
  %v647 = vpop.f32.mrf.mxu0
  %v648 = vadd.f32 %v615, %v647
  %v649 = vpop.f32.mrf.mxu0
  %v650 = vadd.f32 %v617, %v649
  %651 = vmatmul.bf16.gmra.mxu0 %v265
  %v652 = vpop.f32.mrf.mxu0
  %v653 = vadd.f32 %v620, %v652
  %v654 = vpop.f32.mrf.mxu0
  %v655 = vadd.f32 %v622, %v654
  %656 = vmatmul.bf16.gmra.mxu0 %v269
  %v657 = vpop.f32.mrf.mxu0
  %v658 = vadd.f32 %v625, %v657
  %v659 = vpop.f32.mrf.mxu0
  %v660 = vadd.f32 %v627, %v659
  %661 = vmatmul.bf16.gmra.mxu0 %v273
  %v662 = vpop.f32.mrf.mxu0
  %v663 = vadd.f32 %v630, %v662
  %v664 = vpop.f32.mrf.mxu0
  %665 = vdwg.mxu0
  %666 = vst [vmem:[%s5] sm:$0xff] %v643
  %667 = vst [vmem:[%s5 + $0x8] sm:$0xff] %v645
  %668 = vst [vmem:[%s5 + $0x10] sm:$0xff] %v648
  %669 = vst [vmem:[%s5 + $0x18] sm:$0xff] %v650
  %670 = vst [vmem:[%s5 + $0x20] sm:$0xff] %v653
  %671 = vst [vmem:[%s5 + $0x28] sm:$0xff] %v655
  %672 = vst [vmem:[%s5 + $0x30] sm:$0xff] %v658
  %673 = vst [vmem:[%s5 + $0x38] sm:$0xff] %v660
  %674 = vst [vmem:[%s5 + $0x40] sm:$0x3] %v663
  // Predicated region
  $region22: #{unsupervised_detector_forward.4} parent=0 // pred_check
    _
  $region23: #{unsupervised_detector_forward.4} parent=0 // pred_check_branch
    %676 = sbr.rel (0) target = $region25
  $region24: #{unsupervised_detector_forward.4} parent=0 // pred_region
    _
  $region25: #{unsupervised_detector_forward.4} parent=0 // pred_fallthru
    _
  // Predicated region
  $region26: #{unsupervised_detector_forward.4} parent=0 // pred_check
    _
  $region27: #{unsupervised_detector_forward.4} parent=0 // pred_check_branch
    %678 = sbr.rel (0) target = $region29
  $region28: #{unsupervised_detector_forward.4} parent=0 // pred_region
    _
  $region29: #{unsupervised_detector_forward.4} parent=0 // pred_fallthru
    _

</llo_original>
